<compile_context>
chip_gen: v6e
topology: v6e:2x2x1
jax: 0.10.0
libtpu: 0.0.40
codegen_flags: <defaults>
</compile_context>

<pallas_src>
import functools

import jax
import jax.numpy as jnp
from jax import lax
from jax.experimental import pallas as pl
from jax.experimental.pallas import tpu as pltpu

NEG_BIG = -1e30          # large finite negative instead of -inf (NaN-safe masking)
LN_EPS = 1e-5            # torch nn.LayerNorm default


def _round_up(x, m):
    return (x + m - 1) // m * m


def _vmem_limit_bytes():
    """Generation-aware scoped-VMEM cap (review item)."""
    default = 32 * 1024 * 1024
    try:
        cap = int(pltpu.get_tpu_info().vmem_capacity_bytes)
    except Exception:                                    # noqa: BLE001
        return default
    # ~100 MiB on v5e/v6e (128 MiB physical), ~56 MiB on v7x (64 MiB per TC).
    return max(default, min(cap - 8 * 1024 * 1024, 100 * 1024 * 1024))


# --------------------------------------------------------------------------- #
# In-kernel math
# --------------------------------------------------------------------------- #
def _masked_layer_norm(y, d_valid):
    """LayerNorm(elementwise_affine=False) over the first `d_valid` lanes.

    Lanes >= d_valid are zeroed on output so lane padding never leaks into
    later layers.
    """
    S_p, D_p = y.shape
    if d_valid == D_p:
        mean = jnp.mean(y, axis=-1, keepdims=True)
        cen = y - mean
        var = jnp.mean(cen * cen, axis=-1, keepdims=True)
        return cen * lax.rsqrt(var + LN_EPS)
    lane = lax.broadcasted_iota(jnp.int32, (S_p, D_p), 1)
    valid = (lane < d_valid).astype(y.dtype)
    inv_d = 1.0 / d_valid
    mean = jnp.sum(y * valid, axis=-1, keepdims=True) * inv_d
    cen = (y - mean) * valid
    var = jnp.sum(cen * cen, axis=-1, keepdims=True) * inv_d
    return cen * lax.rsqrt(var + LN_EPS)


# contract last dims of both operands: A @ B.T without materializing B.T
_DN_T = (((1,), (1,)), ((), ()))


def _attn_ff_body(x, seq_len, wqkv_ref, wo_ref, w1_ref, b1_ref, w2_ref, b2_ref,
                  *, n_heads, dim, cls_offset):
    """Fused AttentionLayer + FFLayer for one batch element / one layer.

    x: (S_p, D_p) f32 (padded lanes/rows are zero).  Weight refs hold this
    layer's tile (leading block dim of size 1).
    """
    S_p, D_p = x.shape
    H = n_heads
    hd = dim // H
    scale = hd ** -0.5

    x_bf = x.astype(jnp.bfloat16)

    # Causal + key-padding masks built in-kernel (no (B,1,S) mask DMA stream).
    row = lax.broadcasted_iota(jnp.int32, (S_p, S_p), 0)
    col = lax.broadcasted_iota(jnp.int32, (S_p, S_p), 1)
    masked = jnp.logical_or(col > row,                       # causal
                            col >= seq_len + cls_offset)     # key padding

    # Per-head plain 2-D MXU matmuls: no 3H-way broadcast of x, no (H,S,D) f32
    # intermediate, no (H,S,S) logits resident all at once — the output
    # projection accumulates head-by-head into one (S_p, D_p) f32 buffer.
    # TODO(synk): when head_dim % 128 == 0, switch to one 2-D QKV matmul
    #             (N = 3*dim) + lane slicing, per the perf review.
    proj = jnp.zeros((S_p, D_p), jnp.float32)
    for h in range(H):
        wq = wqkv_ref[0, h]              # (hd, D_p) bf16
        wk = wqkv_ref[0, H + h]
        wv = wqkv_ref[0, 2 * H + h]
        q = lax.dot_general(x_bf, wq, _DN_T, preferred_element_type=jnp.float32)
        k = lax.dot_general(x_bf, wk, _DN_T, preferred_element_type=jnp.float32)
        v = lax.dot_general(x_bf, wv, _DN_T, preferred_element_type=jnp.float32)

        logits = lax.dot_general(q.astype(jnp.bfloat16), k.astype(jnp.bfloat16),
                                 _DN_T, preferred_element_type=jnp.float32)
        logits = jnp.where(masked, NEG_BIG, logits * scale)

        m = jnp.max(logits, axis=-1, keepdims=True)
        p = jnp.exp(logits - m)
        denom = jnp.sum(p, axis=-1, keepdims=True)
        p = p * pl.reciprocal(denom, approx=True)            # EUP, not VALU divide

        ctx = jnp.dot(p.astype(jnp.bfloat16), v.astype(jnp.bfloat16),
                      preferred_element_type=jnp.float32)             # (S_p, hd)
        proj = proj + jnp.dot(ctx.astype(jnp.bfloat16), wo_ref[0, h],
                              preferred_element_type=jnp.float32)     # (S_p, D_p)

    y = _masked_layer_norm(x + proj, dim)                    # attention output

    # ---- feed-forward ----
    h1 = jnp.dot(y.astype(jnp.bfloat16), w1_ref[0],
                 preferred_element_type=jnp.float32) + b1_ref[0]
    h1 = jnp.maximum(h1, 0.0)
    y2 = jnp.dot(h1.astype(jnp.bfloat16), w2_ref[0],
                 preferred_element_type=jnp.float32) + b2_ref[0] + y
    return _masked_layer_norm(y2, dim)


# --------------------------------------------------------------------------- #
# Fused all-layers kernel
# --------------------------------------------------------------------------- #
def fused_transformer_kernel(seqlen_ref, x_ref, wqkv_ref, wo_ref, w1_ref,
                             b1_ref, w2_ref, b2_ref, wh_ref, bh_ref,
                             logits_ref, act_ref, *, n_heads, dim, n_layers,
                             cls_offset):
    b = pl.program_id(0)
    l = pl.program_id(1)
    seq_len = seqlen_ref[b]

    @pl.when(l == 0)
    def _():
        act_ref[...] = x_ref[0]          # activation enters VMEM once per batch elem

    y = _attn_ff_body(act_ref[...], seq_len, wqkv_ref, wo_ref, w1_ref, b1_ref,
                      w2_ref, b2_ref, n_heads=n_heads, dim=dim,
                      cls_offset=cls_offset)
    act_ref[...] = y                     # stays resident in VMEM across layers

    @pl.when(l == n_layers - 1)
    def _():
        # Classifier head on the CLS row only (8-row aligned slice for MXU M).
        head_rows = jnp.dot(y[0:8, :].astype(jnp.bfloat16), wh_ref[...],
                            preferred_element_type=jnp.float32)       # (8, C_p)
        logits_ref[0] = head_rows[0:1, :] + bh_ref[...]


def _fused_forward_call(x, seq_lens, weights, *, n_heads, dim, n_layers,
                        cls_offset):
    B, S_p, D_p = x.shape
    H = n_heads
    hd = dim // H
    F_p = weights["w1"].shape[-1]
    C_p = weights["wh"].shape[-1]

    kernel = functools.partial(fused_transformer_kernel, n_heads=H, dim=dim,
                               n_layers=n_layers, cls_offset=cls_offset)

    in_specs = [
        pl.BlockSpec((1, S_p, D_p), lambda b, l, sl: (b, 0, 0)),             # x
        pl.BlockSpec((1, 3 * H, hd, D_p), lambda b, l, sl: (l, 0, 0, 0)),    # wqkv
        pl.BlockSpec((1, H, hd, D_p), lambda b, l, sl: (l, 0, 0, 0)),        # wo
        pl.BlockSpec((1, D_p, F_p), lambda b, l, sl: (l, 0, 0)),             # w1
        pl.BlockSpec((1, 1, F_p), lambda b, l, sl: (l, 0, 0)),               # b1
        pl.BlockSpec((1, F_p, D_p), lambda b, l, sl: (l, 0, 0)),             # w2
        pl.BlockSpec((1, 1, D_p), lambda b, l, sl: (l, 0, 0)),               # b2
        pl.BlockSpec((D_p, C_p), lambda b, l, sl: (0, 0)),                   # w_head
        pl.BlockSpec((1, C_p), lambda b, l, sl: (0, 0)),                     # b_head
    ]
    out_spec = pl.BlockSpec((1, 1, C_p), lambda b, l, sl: (b, 0, 0))

    return pl.pallas_call(
        kernel,
        out_shape=jax.ShapeDtypeStruct((B, 1, C_p), jnp.float32),
        grid_spec=pltpu.PrefetchScalarGridSpec(
            num_scalar_prefetch=1,
            grid=(B, n_layers),
            in_specs=in_specs,
            out_specs=out_spec,
            scratch_shapes=[pltpu.VMEM((S_p, D_p), jnp.float32)]),
        compiler_params=pltpu.CompilerParams(
            dimension_semantics=("parallel", "arbitrary"),
            vmem_limit_bytes=_vmem_limit_bytes()),
    )(seq_lens, x, weights["wqkv"], weights["wo"], weights["w1"], weights["b1"],
      weights["w2"], weights["b2"], weights["wh"], weights["bh"])


# --------------------------------------------------------------------------- #
# Parameters (PyTorch nn.Linear orientation) and kernel-layout preparation
# --------------------------------------------------------------------------- #
def init_params(key, dim, n_layers, n_heads, ff_dim, vocab_size, n_classes):
    """Synthetic params in PyTorch orientation (out_features, in_features)."""
    keys = iter(jax.random.split(key, 4 + 6 * n_layers))
    params = {}

    emb = jax.random.normal(next(keys), (vocab_size + 1, dim)) * dim ** -0.5
    params["emb"] = emb.at[vocab_size].set(0.0).astype(jnp.float32)
    params["cls_token"] = (jax.random.normal(next(keys), (1, 1, dim))
                           * dim ** -0.5).astype(jnp.float32)

    layers = []
    for _ in range(n_layers):
        layers.append(dict(
            w_qkv=(jax.random.normal(next(keys), (3 * dim, dim))
                   * dim ** -0.5).astype(jnp.float32),
            w_o=(jax.random.normal(next(keys), (dim, dim))
                 * dim ** -0.5).astype(jnp.float32),
            w1=(jax.random.normal(next(keys), (ff_dim, dim))
                * dim ** -0.5).astype(jnp.float32),
            b1=(jax.random.normal(next(keys), (ff_dim,)) * 0.02).astype(jnp.float32),
            w2=(jax.random.normal(next(keys), (dim, ff_dim))
                * ff_dim ** -0.5).astype(jnp.float32),
            b2=(jax.random.normal(next(keys), (dim,)) * 0.02).astype(jnp.float32)))
    params["layers"] = layers

    params["w_head"] = (jax.random.normal(next(keys), (n_classes, dim))
                        * dim ** -0.5).astype(jnp.float32)
    params["b_head"] = (jax.random.normal(next(keys), (n_classes,))
                        * 0.02).astype(jnp.float32)
    return params


def prepare_kernel_params(params, *, dim, n_heads, ff_dim, n_classes):
    """Pad to (8,128)-aligned lane-dense layouts, bf16 MXU operands, stack on L.

    wqkv -> (L, 3H, hd, D_p) with g = component*H + head, matching torch's
    `rearrange('b s (h d3)'); chunk(3, dim=2)` column ordering.
    """
    H = n_heads
    hd = dim // H
    D_p = _round_up(dim, 128)
    F_p = _round_up(ff_dim, 128)
    C_p = _round_up(n_classes, 128)
    pad_d = D_p - dim
    pad_f = F_p - ff_dim

    wqkv_l, wo_l, w1_l, b1_l, w2_l, b2_l = [], [], [], [], [], []
    for lp in params["layers"]:
        wqkv = lp["w_qkv"].reshape(H, 3, hd, dim).transpose(1, 0, 2, 3)
        wqkv = wqkv.reshape(3 * H, hd, dim)
        wqkv_l.append(jnp.pad(wqkv, ((0, 0), (0, 0), (0, pad_d))).astype(jnp.bfloat16))
        wo_l.append(jnp.pad(lp["w_o"].T.reshape(H, hd, dim),
                            ((0, 0), (0, 0), (0, pad_d))).astype(jnp.bfloat16))
        w1_l.append(jnp.pad(lp["w1"].T, ((0, pad_d), (0, pad_f))).astype(jnp.bfloat16))
        b1_l.append(jnp.pad(lp["b1"][None, :], ((0, 0), (0, pad_f))))
        w2_l.append(jnp.pad(lp["w2"].T, ((0, pad_f), (0, pad_d))).astype(jnp.bfloat16))
        b2_l.append(jnp.pad(lp["b2"][None, :], ((0, 0), (0, pad_d))))

    return dict(
        wqkv=jnp.stack(wqkv_l),          # (L, 3H, hd, D_p) bf16
        wo=jnp.stack(wo_l),              # (L, H,  hd, D_p) bf16
        w1=jnp.stack(w1_l),              # (L, D_p, F_p)    bf16
        b1=jnp.stack(b1_l),              # (L, 1,  F_p)     f32
        w2=jnp.stack(w2_l),              # (L, F_p, D_p)    bf16
        b2=jnp.stack(b2_l),              # (L, 1,  D_p)     f32
        wh=jnp.pad(params["w_head"].T,
                   ((0, pad_d), (0, C_p - n_classes))).astype(jnp.bfloat16),
        bh=jnp.pad(params["b_head"][None, :], ((0, 0), (0, C_p - n_classes))))


def sinusoidal_pos_emb(seq_len, dim):
    # TODO(synk): PosEmb class is not defined in the source; sinusoidal substitute.
    pos = jnp.arange(seq_len, dtype=jnp.float32)[:, None]
    i = jnp.arange(dim // 2, dtype=jnp.float32)[None, :]
    angles = pos / jnp.power(10000.0, 2.0 * i / dim)
    pe = jnp.zeros((seq_len, dim), jnp.float32)
    pe = pe.at[:, 0::2].set(jnp.sin(angles))
    pe = pe.at[:, 1::2].set(jnp.cos(angles))
    return pe


def node_layer_transformer_forward(params, tokens, seq_lens, *, dim, n_layers,
                                   n_heads, ff_dim, n_classes, append_cls=True,
                                   autoreg=False):
    if autoreg:
        # TODO(synk): autoreg (per-position logits) head not implemented.
        raise NotImplementedError
    assert n_layers >= 1 and dim % n_heads == 0
    B, L = tokens.shape

    # Plain-JAX glue: embedding gather, positional embedding, CLS prepend.
    x = params["emb"][tokens] + sinusoidal_pos_emb(L, dim)[None]
    if append_cls:
        cls = jnp.broadcast_to(params["cls_token"], (B, 1, dim))
        x = jnp.concatenate([cls, x], axis=1)
    S = x.shape[1]

    # Pad to aligned tiles: S to 16 (bf16 sublane packing), D to 128 lanes.
    # Padded lanes stay exactly zero through every layer (masked layer norm);
    # padded positions are masked as keys and never feed the CLS logits.
    S_p = _round_up(S, 16)
    D_p = _round_up(dim, 128)
    x = jnp.pad(x.astype(jnp.float32), ((0, 0), (0, S_p - S), (0, D_p - dim)))

    weights = prepare_kernel_params(params, dim=dim, n_heads=n_heads,
                                    ff_dim=ff_dim, n_classes=n_classes)

    logits_p = _fused_forward_call(
        x, seq_lens.astype(jnp.int32), weights, n_heads=n_heads, dim=dim,
        n_layers=n_layers, cls_offset=1 if append_cls else 0)
    return logits_p[:, 0, :n_classes]


# --------------------------------------------------------------------------- #
if __name__ == "__main__":
    B, L = 2, 8
    dim, n_layers, n_heads, ff_dim = 32, 2, 4, 64
    vocab_size, n_classes = 16, 5

    key = jax.random.PRNGKey(0)
    k_params, k_tok = jax.random.split(key)
    params = init_params(k_params, dim, n_layers, n_heads, ff_dim,
                         vocab_size, n_classes)
    tokens = jax.random.randint(k_tok, (B, L), 0, vocab_size, dtype=jnp.int32)
    seq_lens = jnp.array([8, 5], dtype=jnp.int32)

    fwd = jax.jit(functools.partial(
        node_layer_transformer_forward, dim=dim, n_layers=n_layers,
        n_heads=n_heads, ff_dim=ff_dim, n_classes=n_classes,
        append_cls=True, autoreg=False))
    logits = fwd(params, tokens, seq_lens)
    jax.block_until_ready(logits)
    assert logits.shape == (B, n_classes)
    assert bool(jnp.all(jnp.isfinite(logits)))
    print("KERNEL_OK")
</pallas_src>

<mosaic_0001>
module attributes {stable_mosaic.version = 11 : i64} {
  func.func @fused_transformer_kernel(%arg0: i32, %arg1: i32, %arg2: memref<2xi32, #tpu.memory_space<smem>>, %arg3: memref<1x16x128xf32, #tpu.memory_space<vmem>>, %arg4: memref<1x12x8x128xbf16, #tpu.memory_space<vmem>>, %arg5: memref<1x4x8x128xbf16, #tpu.memory_space<vmem>>, %arg6: memref<1x128x128xbf16, #tpu.memory_space<vmem>>, %arg7: memref<1x1x128xf32, #tpu.memory_space<vmem>>, %arg8: memref<1x128x128xbf16, #tpu.memory_space<vmem>>, %arg9: memref<1x1x128xf32, #tpu.memory_space<vmem>>, %arg10: memref<128x128xbf16, #tpu.memory_space<vmem>>, %arg11: memref<1x128xf32, #tpu.memory_space<vmem>>, %arg12: memref<1x1x128xf32, #tpu.memory_space<vmem>>, %arg13: memref<16x128xf32, #tpu.memory_space<vmem>>) attributes {dimension_semantics = [#tpu.dimension_semantics<parallel>, #tpu.dimension_semantics<arbitrary>], iteration_bounds = array<i64: 2, 2>, scalar_prefetch = 1 : i64, scratch_operands = 1 : i64, tpu.core_type = #tpu.core_type<tc>, window_params = [{transform_indices = @transform_0, window_bounds = array<i64: 1, 16, 128>}, {transform_indices = @transform_1, window_bounds = array<i64: 1, 12, 8, 128>}, {transform_indices = @transform_2, window_bounds = array<i64: 1, 4, 8, 128>}, {transform_indices = @transform_3, window_bounds = array<i64: 1, 128, 128>}, {transform_indices = @transform_4, window_bounds = array<i64: 1, 1, 128>}, {transform_indices = @transform_5, window_bounds = array<i64: 1, 128, 128>}, {transform_indices = @transform_6, window_bounds = array<i64: 1, 1, 128>}, {pipeline_mode = #tpu.pipeline_mode<synchronous>, transform_indices = @transform_7, window_bounds = array<i64: 128, 128>}, {pipeline_mode = #tpu.pipeline_mode<synchronous>, transform_indices = @transform_8, window_bounds = array<i64: 1, 128>}, {transform_indices = @transform_9, window_bounds = array<i64: 1, 1, 128>}]} {
    %0 = arith.index_cast %arg0 : i32 to index
    %1 = memref.load %arg2[%0] : memref<2xi32, #tpu.memory_space<smem>>
    %c0_i32 = arith.constant 0 : i32
    %2 = arith.cmpi eq, %arg1, %c0_i32 : i32
    %3 = arith.extui %2 : i1 to i32
    %c0_i32_0 = arith.constant 0 : i32
    %4 = arith.cmpi ne, %3, %c0_i32_0 : i32
    scf.if %4 {
      %c0_125 = arith.constant 0 : index
      %c0_126 = arith.constant 0 : index
      %c0_127 = arith.constant 0 : index
      %221 = vector.load %arg3[%c0_125, %c0_126, %c0_127] : memref<1x16x128xf32, #tpu.memory_space<vmem>>, vector<1x16x128xf32>
      %222 = vector.shape_cast %221 : vector<1x16x128xf32> to vector<16x128xf32>
      %c0_128 = arith.constant 0 : index
      %c0_129 = arith.constant 0 : index
      %223 = vector.load %arg13[%c0_128, %c0_129] : memref<16x128xf32, #tpu.memory_space<vmem>>, vector<16x128xf32>
      tpu.vector_store %arg13[%c0_128, %c0_129], %222 {strides = array<i32>} : memref<16x128xf32, #tpu.memory_space<vmem>>, vector<16x128xf32>,
    } else {
    }
    %c0 = arith.constant 0 : index
    %c0_1 = arith.constant 0 : index
    %5 = vector.load %arg13[%c0, %c0_1] : memref<16x128xf32, #tpu.memory_space<vmem>>, vector<16x128xf32>
    %6 = arith.truncf %5 : vector<16x128xf32> to vector<16x128xbf16>
    %7 = tpu.iota {dimensions = array<i32: 0>} : vector<16x16xi32>
    %8 = tpu.iota {dimensions = array<i32: 1>} : vector<16x16xi32>
    %9 = arith.cmpi sgt, %8, %7 : vector<16x16xi32>
    %c1_i32 = arith.constant 1 : i32
    %10 = arith.addi %1, %c1_i32 : i32
    %11 = vector.broadcast %10 : i32 to vector<16x16xi32>
    %12 = arith.cmpi sge, %8, %11 : vector<16x16xi32>
    %13 = arith.ori %9, %12 : vector<16x16xi1>
    %cst = arith.constant 0.000000e+00 : f32
    %14 = vector.broadcast %cst : f32 to vector<16x128xf32>
    %c0_2 = arith.constant 0 : index
    %c0_3 = arith.constant 0 : index
    %c0_4 = arith.constant 0 : index
    %c0_5 = arith.constant 0 : index
    %15 = vector.load %arg4[%c0_2, %c0_3, %c0_4, %c0_5] : memref<1x12x8x128xbf16, #tpu.memory_space<vmem>>, vector<1x1x8x128xbf16>
    %16 = vector.shape_cast %15 : vector<1x1x8x128xbf16> to vector<8x128xbf16>
    %c0_6 = arith.constant 0 : index
    %c4 = arith.constant 4 : index
    %c0_7 = arith.constant 0 : index
    %c0_8 = arith.constant 0 : index
    %17 = vector.load %arg4[%c0_6, %c4, %c0_7, %c0_8] : memref<1x12x8x128xbf16, #tpu.memory_space<vmem>>, vector<1x1x8x128xbf16>
    %18 = vector.shape_cast %17 : vector<1x1x8x128xbf16> to vector<8x128xbf16>
    %c0_9 = arith.constant 0 : index
    %c8 = arith.constant 8 : index
    %c0_10 = arith.constant 0 : index
    %c0_11 = arith.constant 0 : index
    %19 = vector.load %arg4[%c0_9, %c8, %c0_10, %c0_11] : memref<1x12x8x128xbf16, #tpu.memory_space<vmem>>, vector<1x1x8x128xbf16>
    %20 = vector.shape_cast %19 : vector<1x1x8x128xbf16> to vector<8x128xbf16>
    %cst_12 = arith.constant dense<0.000000e+00> : vector<16x8xf32>
    %21 = tpu.matmul %6, %16, %cst_12 {dimension_numbers = #tpu.dot_dimension_numbers<[1], [1], [0], [0], [0, 0, 1, 0], [], []>} : vector<16x128xbf16>, vector<8x128xbf16>, vector<16x8xf32> -> vector<16x8xf32>
    %cst_13 = arith.constant dense<0.000000e+00> : vector<16x8xf32>
    %22 = tpu.matmul %6, %18, %cst_13 {dimension_numbers = #tpu.dot_dimension_numbers<[1], [1], [0], [0], [0, 0, 1, 0], [], []>} : vector<16x128xbf16>, vector<8x128xbf16>, vector<16x8xf32> -> vector<16x8xf32>
    %cst_14 = arith.constant dense<0.000000e+00> : vector<16x8xf32>
    %23 = tpu.matmul %6, %20, %cst_14 {dimension_numbers = #tpu.dot_dimension_numbers<[1], [1], [0], [0], [0, 0, 1, 0], [], []>} : vector<16x128xbf16>, vector<8x128xbf16>, vector<16x8xf32> -> vector<16x8xf32>
    %24 = arith.truncf %21 : vector<16x8xf32> to vector<16x8xbf16>
    %25 = arith.truncf %22 : vector<16x8xf32> to vector<16x8xbf16>
    %cst_15 = arith.constant dense<0.000000e+00> : vector<16x16xf32>
    %26 = tpu.matmul %24, %25, %cst_15 {dimension_numbers = #tpu.dot_dimension_numbers<[1], [1], [0], [0], [0, 0, 1, 0], [], []>} : vector<16x8xbf16>, vector<16x8xbf16>, vector<16x16xf32> -> vector<16x16xf32>
    %cst_16 = arith.constant 0.353553385 : f32
    %27 = vector.broadcast %cst_16 : f32 to vector<16x16xf32>
    %28 = arith.mulf %26, %27 : vector<16x16xf32>
    %cst_17 = arith.constant -1.000000e+30 : f32
    %29 = vector.broadcast %cst_17 : f32 to vector<16x16xf32>
    %30 = arith.select %13, %29, %28 : vector<16x16xi1>, vector<16x16xf32>
    %cst_18 = arith.constant dense<0xFF800000> : vector<16xf32>
    %31 = vector.multi_reduction <maximumf>, %30, %cst_18 [1] : vector<16x16xf32> to vector<16xf32>
    %32 = vector.shape_cast %31 : vector<16xf32> to vector<16x1xf32>
    %33 = vector.broadcast %32 : vector<16x1xf32> to vector<16x16xf32>
    %34 = arith.subf %30, %33 : vector<16x16xf32>
    %35 = math.exp %34 : vector<16x16xf32>
    %cst_19 = arith.constant dense<0.000000e+00> : vector<16xf32>
    %36 = vector.multi_reduction <add>, %35, %cst_19 [1] : vector<16x16xf32> to vector<16xf32>
    %37 = vector.shape_cast %36 : vector<16xf32> to vector<16x1xf32>
    %38 = tpu.reciprocal %37 {approx = true} : vector<16x1xf32> -> vector<16x1xf32>
    %39 = vector.broadcast %38 : vector<16x1xf32> to vector<16x16xf32>
    %40 = arith.mulf %35, %39 : vector<16x16xf32>
    %41 = arith.truncf %40 : vector<16x16xf32> to vector<16x16xbf16>
    %42 = arith.truncf %23 : vector<16x8xf32> to vector<16x8xbf16>
    %cst_20 = arith.constant dense<0.000000e+00> : vector<16x8xf32>
    %43 = tpu.matmul %41, %42, %cst_20 {dimension_numbers = #tpu.dot_dimension_numbers<[1], [0], [0], [1], [0, 0, 1, 1], [], []>} : vector<16x16xbf16>, vector<16x8xbf16>, vector<16x8xf32> -> vector<16x8xf32>
    %44 = arith.truncf %43 : vector<16x8xf32> to vector<16x8xbf16>
    %c0_21 = arith.constant 0 : index
    %c0_22 = arith.constant 0 : index
    %c0_23 = arith.constant 0 : index
    %c0_24 = arith.constant 0 : index
    %45 = vector.load %arg5[%c0_21, %c0_22, %c0_23, %c0_24] : memref<1x4x8x128xbf16, #tpu.memory_space<vmem>>, vector<1x1x8x128xbf16>
    %46 = vector.shape_cast %45 : vector<1x1x8x128xbf16> to vector<8x128xbf16>
    %cst_25 = arith.constant dense<0.000000e+00> : vector<16x128xf32>
    %47 = tpu.matmul %44, %46, %cst_25 {dimension_numbers = #tpu.dot_dimension_numbers<[1], [0], [0], [1], [0, 0, 1, 1], [], []>} : vector<16x8xbf16>, vector<8x128xbf16>, vector<16x128xf32> -> vector<16x128xf32>
    %48 = arith.addf %14, %47 : vector<16x128xf32>
    %c0_26 = arith.constant 0 : index
    %c1 = arith.constant 1 : index
    %c0_27 = arith.constant 0 : index
    %c0_28 = arith.constant 0 : index
    %49 = vector.load %arg4[%c0_26, %c1, %c0_27, %c0_28] : memref<1x12x8x128xbf16, #tpu.memory_space<vmem>>, vector<1x1x8x128xbf16>
    %50 = vector.shape_cast %49 : vector<1x1x8x128xbf16> to vector<8x128xbf16>
    %c0_29 = arith.constant 0 : index
    %c5 = arith.constant 5 : index
    %c0_30 = arith.constant 0 : index
    %c0_31 = arith.constant 0 : index
    %51 = vector.load %arg4[%c0_29, %c5, %c0_30, %c0_31] : memref<1x12x8x128xbf16, #tpu.memory_space<vmem>>, vector<1x1x8x128xbf16>
    %52 = vector.shape_cast %51 : vector<1x1x8x128xbf16> to vector<8x128xbf16>
    %c0_32 = arith.constant 0 : index
    %c9 = arith.constant 9 : index
    %c0_33 = arith.constant 0 : index
    %c0_34 = arith.constant 0 : index
    %53 = vector.load %arg4[%c0_32, %c9, %c0_33, %c0_34] : memref<1x12x8x128xbf16, #tpu.memory_space<vmem>>, vector<1x1x8x128xbf16>
    %54 = vector.shape_cast %53 : vector<1x1x8x128xbf16> to vector<8x128xbf16>
    %cst_35 = arith.constant dense<0.000000e+00> : vector<16x8xf32>
    %55 = tpu.matmul %6, %50, %cst_35 {dimension_numbers = #tpu.dot_dimension_numbers<[1], [1], [0], [0], [0, 0, 1, 0], [], []>} : vector<16x128xbf16>, vector<8x128xbf16>, vector<16x8xf32> -> vector<16x8xf32>
    %cst_36 = arith.constant dense<0.000000e+00> : vector<16x8xf32>
    %56 = tpu.matmul %6, %52, %cst_36 {dimension_numbers = #tpu.dot_dimension_numbers<[1], [1], [0], [0], [0, 0, 1, 0], [], []>} : vector<16x128xbf16>, vector<8x128xbf16>, vector<16x8xf32> -> vector<16x8xf32>
    %cst_37 = arith.constant dense<0.000000e+00> : vector<16x8xf32>
    %57 = tpu.matmul %6, %54, %cst_37 {dimension_numbers = #tpu.dot_dimension_numbers<[1], [1], [0], [0], [0, 0, 1, 0], [], []>} : vector<16x128xbf16>, vector<8x128xbf16>, vector<16x8xf32> -> vector<16x8xf32>
    %58 = arith.truncf %55 : vector<16x8xf32> to vector<16x8xbf16>
    %59 = arith.truncf %56 : vector<16x8xf32> to vector<16x8xbf16>
    %cst_38 = arith.constant dense<0.000000e+00> : vector<16x16xf32>
    %60 = tpu.matmul %58, %59, %cst_38 {dimension_numbers = #tpu.dot_dimension_numbers<[1], [1], [0], [0], [0, 0, 1, 0], [], []>} : vector<16x8xbf16>, vector<16x8xbf16>, vector<16x16xf32> -> vector<16x16xf32>
    %cst_39 = arith.constant 0.353553385 : f32
    %61 = vector.broadcast %cst_39 : f32 to vector<16x16xf32>
    %62 = arith.mulf %60, %61 : vector<16x16xf32>
    %cst_40 = arith.constant -1.000000e+30 : f32
    %63 = vector.broadcast %cst_40 : f32 to vector<16x16xf32>
    %64 = arith.select %13, %63, %62 : vector<16x16xi1>, vector<16x16xf32>
    %cst_41 = arith.constant dense<0xFF800000> : vector<16xf32>
    %65 = vector.multi_reduction <maximumf>, %64, %cst_41 [1] : vector<16x16xf32> to vector<16xf32>
    %66 = vector.shape_cast %65 : vector<16xf32> to vector<16x1xf32>
    %67 = vector.broadcast %66 : vector<16x1xf32> to vector<16x16xf32>
    %68 = arith.subf %64, %67 : vector<16x16xf32>
    %69 = math.exp %68 : vector<16x16xf32>
    %cst_42 = arith.constant dense<0.000000e+00> : vector<16xf32>
    %70 = vector.multi_reduction <add>, %69, %cst_42 [1] : vector<16x16xf32> to vector<16xf32>
    %71 = vector.shape_cast %70 : vector<16xf32> to vector<16x1xf32>
    %72 = tpu.reciprocal %71 {approx = true} : vector<16x1xf32> -> vector<16x1xf32>
    %73 = vector.broadcast %72 : vector<16x1xf32> to vector<16x16xf32>
    %74 = arith.mulf %69, %73 : vector<16x16xf32>
    %75 = arith.truncf %74 : vector<16x16xf32> to vector<16x16xbf16>
    %76 = arith.truncf %57 : vector<16x8xf32> to vector<16x8xbf16>
    %cst_43 = arith.constant dense<0.000000e+00> : vector<16x8xf32>
    %77 = tpu.matmul %75, %76, %cst_43 {dimension_numbers = #tpu.dot_dimension_numbers<[1], [0], [0], [1], [0, 0, 1, 1], [], []>} : vector<16x16xbf16>, vector<16x8xbf16>, vector<16x8xf32> -> vector<16x8xf32>
    %78 = arith.truncf %77 : vector<16x8xf32> to vector<16x8xbf16>
    %c0_44 = arith.constant 0 : index
    %c1_45 = arith.constant 1 : index
    %c0_46 = arith.constant 0 : index
    %c0_47 = arith.constant 0 : index
    %79 = vector.load %arg5[%c0_44, %c1_45, %c0_46, %c0_47] : memref<1x4x8x128xbf16, #tpu.memory_space<vmem>>, vector<1x1x8x128xbf16>
    %80 = vector.shape_cast %79 : vector<1x1x8x128xbf16> to vector<8x128xbf16>
    %cst_48 = arith.constant dense<0.000000e+00> : vector<16x128xf32>
    %81 = tpu.matmul %78, %80, %cst_48 {dimension_numbers = #tpu.dot_dimension_numbers<[1], [0], [0], [1], [0, 0, 1, 1], [], []>} : vector<16x8xbf16>, vector<8x128xbf16>, vector<16x128xf32> -> vector<16x128xf32>
    %82 = arith.addf %48, %81 : vector<16x128xf32>
    %c0_49 = arith.constant 0 : index
    %c2 = arith.constant 2 : index
    %c0_50 = arith.constant 0 : index
    %c0_51 = arith.constant 0 : index
    %83 = vector.load %arg4[%c0_49, %c2, %c0_50, %c0_51] : memref<1x12x8x128xbf16, #tpu.memory_space<vmem>>, vector<1x1x8x128xbf16>
    %84 = vector.shape_cast %83 : vector<1x1x8x128xbf16> to vector<8x128xbf16>
    %c0_52 = arith.constant 0 : index
    %c6 = arith.constant 6 : index
    %c0_53 = arith.constant 0 : index
    %c0_54 = arith.constant 0 : index
    %85 = vector.load %arg4[%c0_52, %c6, %c0_53, %c0_54] : memref<1x12x8x128xbf16, #tpu.memory_space<vmem>>, vector<1x1x8x128xbf16>
    %86 = vector.shape_cast %85 : vector<1x1x8x128xbf16> to vector<8x128xbf16>
    %c0_55 = arith.constant 0 : index
    %c10 = arith.constant 10 : index
    %c0_56 = arith.constant 0 : index
    %c0_57 = arith.constant 0 : index
    %87 = vector.load %arg4[%c0_55, %c10, %c0_56, %c0_57] : memref<1x12x8x128xbf16, #tpu.memory_space<vmem>>, vector<1x1x8x128xbf16>
    %88 = vector.shape_cast %87 : vector<1x1x8x128xbf16> to vector<8x128xbf16>
    %cst_58 = arith.constant dense<0.000000e+00> : vector<16x8xf32>
    %89 = tpu.matmul %6, %84, %cst_58 {dimension_numbers = #tpu.dot_dimension_numbers<[1], [1], [0], [0], [0, 0, 1, 0], [], []>} : vector<16x128xbf16>, vector<8x128xbf16>, vector<16x8xf32> -> vector<16x8xf32>
    %cst_59 = arith.constant dense<0.000000e+00> : vector<16x8xf32>
    %90 = tpu.matmul %6, %86, %cst_59 {dimension_numbers = #tpu.dot_dimension_numbers<[1], [1], [0], [0], [0, 0, 1, 0], [], []>} : vector<16x128xbf16>, vector<8x128xbf16>, vector<16x8xf32> -> vector<16x8xf32>
    %cst_60 = arith.constant dense<0.000000e+00> : vector<16x8xf32>
    %91 = tpu.matmul %6, %88, %cst_60 {dimension_numbers = #tpu.dot_dimension_numbers<[1], [1], [0], [0], [0, 0, 1, 0], [], []>} : vector<16x128xbf16>, vector<8x128xbf16>, vector<16x8xf32> -> vector<16x8xf32>
    %92 = arith.truncf %89 : vector<16x8xf32> to vector<16x8xbf16>
    %93 = arith.truncf %90 : vector<16x8xf32> to vector<16x8xbf16>
    %cst_61 = arith.constant dense<0.000000e+00> : vector<16x16xf32>
    %94 = tpu.matmul %92, %93, %cst_61 {dimension_numbers = #tpu.dot_dimension_numbers<[1], [1], [0], [0], [0, 0, 1, 0], [], []>} : vector<16x8xbf16>, vector<16x8xbf16>, vector<16x16xf32> -> vector<16x16xf32>
    %cst_62 = arith.constant 0.353553385 : f32
    %95 = vector.broadcast %cst_62 : f32 to vector<16x16xf32>
    %96 = arith.mulf %94, %95 : vector<16x16xf32>
    %cst_63 = arith.constant -1.000000e+30 : f32
    %97 = vector.broadcast %cst_63 : f32 to vector<16x16xf32>
    %98 = arith.select %13, %97, %96 : vector<16x16xi1>, vector<16x16xf32>
    %cst_64 = arith.constant dense<0xFF800000> : vector<16xf32>
    %99 = vector.multi_reduction <maximumf>, %98, %cst_64 [1] : vector<16x16xf32> to vector<16xf32>
    %100 = vector.shape_cast %99 : vector<16xf32> to vector<16x1xf32>
    %101 = vector.broadcast %100 : vector<16x1xf32> to vector<16x16xf32>
    %102 = arith.subf %98, %101 : vector<16x16xf32>
    %103 = math.exp %102 : vector<16x16xf32>
    %cst_65 = arith.constant dense<0.000000e+00> : vector<16xf32>
    %104 = vector.multi_reduction <add>, %103, %cst_65 [1] : vector<16x16xf32> to vector<16xf32>
    %105 = vector.shape_cast %104 : vector<16xf32> to vector<16x1xf32>
    %106 = tpu.reciprocal %105 {approx = true} : vector<16x1xf32> -> vector<16x1xf32>
    %107 = vector.broadcast %106 : vector<16x1xf32> to vector<16x16xf32>
    %108 = arith.mulf %103, %107 : vector<16x16xf32>
    %109 = arith.truncf %108 : vector<16x16xf32> to vector<16x16xbf16>
    %110 = arith.truncf %91 : vector<16x8xf32> to vector<16x8xbf16>
    %cst_66 = arith.constant dense<0.000000e+00> : vector<16x8xf32>
    %111 = tpu.matmul %109, %110, %cst_66 {dimension_numbers = #tpu.dot_dimension_numbers<[1], [0], [0], [1], [0, 0, 1, 1], [], []>} : vector<16x16xbf16>, vector<16x8xbf16>, vector<16x8xf32> -> vector<16x8xf32>
    %112 = arith.truncf %111 : vector<16x8xf32> to vector<16x8xbf16>
    %c0_67 = arith.constant 0 : index
    %c2_68 = arith.constant 2 : index
    %c0_69 = arith.constant 0 : index
    %c0_70 = arith.constant 0 : index
    %113 = vector.load %arg5[%c0_67, %c2_68, %c0_69, %c0_70] : memref<1x4x8x128xbf16, #tpu.memory_space<vmem>>, vector<1x1x8x128xbf16>
    %114 = vector.shape_cast %113 : vector<1x1x8x128xbf16> to vector<8x128xbf16>
    %cst_71 = arith.constant dense<0.000000e+00> : vector<16x128xf32>
    %115 = tpu.matmul %112, %114, %cst_71 {dimension_numbers = #tpu.dot_dimension_numbers<[1], [0], [0], [1], [0, 0, 1, 1], [], []>} : vector<16x8xbf16>, vector<8x128xbf16>, vector<16x128xf32> -> vector<16x128xf32>
    %116 = arith.addf %82, %115 : vector<16x128xf32>
    %c0_72 = arith.constant 0 : index
    %c3 = arith.constant 3 : index
    %c0_73 = arith.constant 0 : index
    %c0_74 = arith.constant 0 : index
    %117 = vector.load %arg4[%c0_72, %c3, %c0_73, %c0_74] : memref<1x12x8x128xbf16, #tpu.memory_space<vmem>>, vector<1x1x8x128xbf16>
    %118 = vector.shape_cast %117 : vector<1x1x8x128xbf16> to vector<8x128xbf16>
    %c0_75 = arith.constant 0 : index
    %c7 = arith.constant 7 : index
    %c0_76 = arith.constant 0 : index
    %c0_77 = arith.constant 0 : index
    %119 = vector.load %arg4[%c0_75, %c7, %c0_76, %c0_77] : memref<1x12x8x128xbf16, #tpu.memory_space<vmem>>, vector<1x1x8x128xbf16>
    %120 = vector.shape_cast %119 : vector<1x1x8x128xbf16> to vector<8x128xbf16>
    %c0_78 = arith.constant 0 : index
    %c11 = arith.constant 11 : index
    %c0_79 = arith.constant 0 : index
    %c0_80 = arith.constant 0 : index
    %121 = vector.load %arg4[%c0_78, %c11, %c0_79, %c0_80] : memref<1x12x8x128xbf16, #tpu.memory_space<vmem>>, vector<1x1x8x128xbf16>
    %122 = vector.shape_cast %121 : vector<1x1x8x128xbf16> to vector<8x128xbf16>
    %cst_81 = arith.constant dense<0.000000e+00> : vector<16x8xf32>
    %123 = tpu.matmul %6, %118, %cst_81 {dimension_numbers = #tpu.dot_dimension_numbers<[1], [1], [0], [0], [0, 0, 1, 0], [], []>} : vector<16x128xbf16>, vector<8x128xbf16>, vector<16x8xf32> -> vector<16x8xf32>
    %cst_82 = arith.constant dense<0.000000e+00> : vector<16x8xf32>
    %124 = tpu.matmul %6, %120, %cst_82 {dimension_numbers = #tpu.dot_dimension_numbers<[1], [1], [0], [0], [0, 0, 1, 0], [], []>} : vector<16x128xbf16>, vector<8x128xbf16>, vector<16x8xf32> -> vector<16x8xf32>
    %cst_83 = arith.constant dense<0.000000e+00> : vector<16x8xf32>
    %125 = tpu.matmul %6, %122, %cst_83 {dimension_numbers = #tpu.dot_dimension_numbers<[1], [1], [0], [0], [0, 0, 1, 0], [], []>} : vector<16x128xbf16>, vector<8x128xbf16>, vector<16x8xf32> -> vector<16x8xf32>
    %126 = arith.truncf %123 : vector<16x8xf32> to vector<16x8xbf16>
    %127 = arith.truncf %124 : vector<16x8xf32> to vector<16x8xbf16>
    %cst_84 = arith.constant dense<0.000000e+00> : vector<16x16xf32>
    %128 = tpu.matmul %126, %127, %cst_84 {dimension_numbers = #tpu.dot_dimension_numbers<[1], [1], [0], [0], [0, 0, 1, 0], [], []>} : vector<16x8xbf16>, vector<16x8xbf16>, vector<16x16xf32> -> vector<16x16xf32>
    %cst_85 = arith.constant 0.353553385 : f32
    %129 = vector.broadcast %cst_85 : f32 to vector<16x16xf32>
    %130 = arith.mulf %128, %129 : vector<16x16xf32>
    %cst_86 = arith.constant -1.000000e+30 : f32
    %131 = vector.broadcast %cst_86 : f32 to vector<16x16xf32>
    %132 = arith.select %13, %131, %130 : vector<16x16xi1>, vector<16x16xf32>
    %cst_87 = arith.constant dense<0xFF800000> : vector<16xf32>
    %133 = vector.multi_reduction <maximumf>, %132, %cst_87 [1] : vector<16x16xf32> to vector<16xf32>
    %134 = vector.shape_cast %133 : vector<16xf32> to vector<16x1xf32>
    %135 = vector.broadcast %134 : vector<16x1xf32> to vector<16x16xf32>
    %136 = arith.subf %132, %135 : vector<16x16xf32>
    %137 = math.exp %136 : vector<16x16xf32>
    %cst_88 = arith.constant dense<0.000000e+00> : vector<16xf32>
    %138 = vector.multi_reduction <add>, %137, %cst_88 [1] : vector<16x16xf32> to vector<16xf32>
    %139 = vector.shape_cast %138 : vector<16xf32> to vector<16x1xf32>
    %140 = tpu.reciprocal %139 {approx = true} : vector<16x1xf32> -> vector<16x1xf32>
    %141 = vector.broadcast %140 : vector<16x1xf32> to vector<16x16xf32>
    %142 = arith.mulf %137, %141 : vector<16x16xf32>
    %143 = arith.truncf %142 : vector<16x16xf32> to vector<16x16xbf16>
    %144 = arith.truncf %125 : vector<16x8xf32> to vector<16x8xbf16>
    %cst_89 = arith.constant dense<0.000000e+00> : vector<16x8xf32>
    %145 = tpu.matmul %143, %144, %cst_89 {dimension_numbers = #tpu.dot_dimension_numbers<[1], [0], [0], [1], [0, 0, 1, 1], [], []>} : vector<16x16xbf16>, vector<16x8xbf16>, vector<16x8xf32> -> vector<16x8xf32>
    %146 = arith.truncf %145 : vector<16x8xf32> to vector<16x8xbf16>
    %c0_90 = arith.constant 0 : index
    %c3_91 = arith.constant 3 : index
    %c0_92 = arith.constant 0 : index
    %c0_93 = arith.constant 0 : index
    %147 = vector.load %arg5[%c0_90, %c3_91, %c0_92, %c0_93] : memref<1x4x8x128xbf16, #tpu.memory_space<vmem>>, vector<1x1x8x128xbf16>
    %148 = vector.shape_cast %147 : vector<1x1x8x128xbf16> to vector<8x128xbf16>
    %cst_94 = arith.constant dense<0.000000e+00> : vector<16x128xf32>
    %149 = tpu.matmul %146, %148, %cst_94 {dimension_numbers = #tpu.dot_dimension_numbers<[1], [0], [0], [1], [0, 0, 1, 1], [], []>} : vector<16x8xbf16>, vector<8x128xbf16>, vector<16x128xf32> -> vector<16x128xf32>
    %150 = arith.addf %116, %149 : vector<16x128xf32>
    %151 = arith.addf %5, %150 : vector<16x128xf32>
    %152 = tpu.iota {dimensions = array<i32: 1>} : vector<16x128xi32>
    %c32_i32 = arith.constant 32 : i32
    %153 = vector.broadcast %c32_i32 : i32 to vector<16x128xi32>
    %154 = arith.cmpi slt, %152, %153 : vector<16x128xi32>
    %155 = arith.extui %154 : vector<16x128xi1> to vector<16x128xi32>
    %156 = arith.sitofp %155 : vector<16x128xi32> to vector<16x128xf32>
    %157 = arith.mulf %151, %156 : vector<16x128xf32>
    %cst_95 = arith.constant dense<0.000000e+00> : vector<16xf32>
    %158 = vector.multi_reduction <add>, %157, %cst_95 [1] : vector<16x128xf32> to vector<16xf32>
    %159 = vector.shape_cast %158 : vector<16xf32> to vector<16x1xf32>
    %cst_96 = arith.constant 3.125000e-02 : f32
    %160 = vector.broadcast %cst_96 : f32 to vector<16x1xf32>
    %161 = arith.mulf %159, %160 : vector<16x1xf32>
    %162 = vector.broadcast %161 : vector<16x1xf32> to vector<16x128xf32>
    %163 = arith.subf %151, %162 : vector<16x128xf32>
    %164 = arith.mulf %163, %156 : vector<16x128xf32>
    %165 = arith.mulf %164, %164 : vector<16x128xf32>
    %cst_97 = arith.constant dense<0.000000e+00> : vector<16xf32>
    %166 = vector.multi_reduction <add>, %165, %cst_97 [1] : vector<16x128xf32> to vector<16xf32>
    %167 = vector.shape_cast %166 : vector<16xf32> to vector<16x1xf32>
    %cst_98 = arith.constant 3.125000e-02 : f32
    %168 = vector.broadcast %cst_98 : f32 to vector<16x1xf32>
    %169 = arith.mulf %167, %168 : vector<16x1xf32>
    %cst_99 = arith.constant 9.99999974E-6 : f32
    %170 = vector.broadcast %cst_99 : f32 to vector<16x1xf32>
    %171 = arith.addf %169, %170 : vector<16x1xf32>
    %172 = math.rsqrt %171 : vector<16x1xf32>
    %173 = vector.broadcast %172 : vector<16x1xf32> to vector<16x128xf32>
    %174 = arith.mulf %164, %173 : vector<16x128xf32>
    %175 = arith.truncf %174 : vector<16x128xf32> to vector<16x128xbf16>
    %c0_100 = arith.constant 0 : index
    %c0_101 = arith.constant 0 : index
    %c0_102 = arith.constant 0 : index
    %176 = vector.load %arg6[%c0_100, %c0_101, %c0_102] : memref<1x128x128xbf16, #tpu.memory_space<vmem>>, vector<1x128x128xbf16>
    %177 = vector.shape_cast %176 : vector<1x128x128xbf16> to vector<128x128xbf16>
    %cst_103 = arith.constant dense<0.000000e+00> : vector<16x128xf32>
    %178 = tpu.matmul %175, %177, %cst_103 {dimension_numbers = #tpu.dot_dimension_numbers<[1], [0], [0], [1], [0, 0, 1, 1], [], []>} : vector<16x128xbf16>, vector<128x128xbf16>, vector<16x128xf32> -> vector<16x128xf32>
    %c0_104 = arith.constant 0 : index
    %c0_105 = arith.constant 0 : index
    %c0_106 = arith.constant 0 : index
    %179 = vector.load %arg7[%c0_104, %c0_105, %c0_106] : memref<1x1x128xf32, #tpu.memory_space<vmem>>, vector<1x1x128xf32>
    %180 = vector.shape_cast %179 : vector<1x1x128xf32> to vector<1x128xf32>
    %181 = vector.broadcast %180 : vector<1x128xf32> to vector<16x128xf32>
    %182 = arith.addf %178, %181 : vector<16x128xf32>
    %cst_107 = arith.constant 0.000000e+00 : f32
    %183 = vector.broadcast %cst_107 : f32 to vector<16x128xf32>
    %184 = arith.maximumf %182, %183 : vector<16x128xf32>
    %185 = arith.truncf %184 : vector<16x128xf32> to vector<16x128xbf16>
    %c0_108 = arith.constant 0 : index
    %c0_109 = arith.constant 0 : index
    %c0_110 = arith.constant 0 : index
    %186 = vector.load %arg8[%c0_108, %c0_109, %c0_110] : memref<1x128x128xbf16, #tpu.memory_space<vmem>>, vector<1x128x128xbf16>
    %187 = vector.shape_cast %186 : vector<1x128x128xbf16> to vector<128x128xbf16>
    %cst_111 = arith.constant dense<0.000000e+00> : vector<16x128xf32>
    %188 = tpu.matmul %185, %187, %cst_111 {dimension_numbers = #tpu.dot_dimension_numbers<[1], [0], [0], [1], [0, 0, 1, 1], [], []>} : vector<16x128xbf16>, vector<128x128xbf16>, vector<16x128xf32> -> vector<16x128xf32>
    %c0_112 = arith.constant 0 : index
    %c0_113 = arith.constant 0 : index
    %c0_114 = arith.constant 0 : index
    %189 = vector.load %arg9[%c0_112, %c0_113, %c0_114] : memref<1x1x128xf32, #tpu.memory_space<vmem>>, vector<1x1x128xf32>
    %190 = vector.shape_cast %189 : vector<1x1x128xf32> to vector<1x128xf32>
    %191 = vector.broadcast %190 : vector<1x128xf32> to vector<16x128xf32>
    %192 = arith.addf %188, %191 : vector<16x128xf32>
    %193 = arith.addf %192, %174 : vector<16x128xf32>
    %194 = tpu.iota {dimensions = array<i32: 1>} : vector<16x128xi32>
    %c32_i32_115 = arith.constant 32 : i32
    %195 = vector.broadcast %c32_i32_115 : i32 to vector<16x128xi32>
    %196 = arith.cmpi slt, %194, %195 : vector<16x128xi32>
    %197 = arith.extui %196 : vector<16x128xi1> to vector<16x128xi32>
    %198 = arith.sitofp %197 : vector<16x128xi32> to vector<16x128xf32>
    %199 = arith.mulf %193, %198 : vector<16x128xf32>
    %cst_116 = arith.constant dense<0.000000e+00> : vector<16xf32>
    %200 = vector.multi_reduction <add>, %199, %cst_116 [1] : vector<16x128xf32> to vector<16xf32>
    %201 = vector.shape_cast %200 : vector<16xf32> to vector<16x1xf32>
    %cst_117 = arith.constant 3.125000e-02 : f32
    %202 = vector.broadcast %cst_117 : f32 to vector<16x1xf32>
    %203 = arith.mulf %201, %202 : vector<16x1xf32>
    %204 = vector.broadcast %203 : vector<16x1xf32> to vector<16x128xf32>
    %205 = arith.subf %193, %204 : vector<16x128xf32>
    %206 = arith.mulf %205, %198 : vector<16x128xf32>
    %207 = arith.mulf %206, %206 : vector<16x128xf32>
    %cst_118 = arith.constant dense<0.000000e+00> : vector<16xf32>
    %208 = vector.multi_reduction <add>, %207, %cst_118 [1] : vector<16x128xf32> to vector<16xf32>
    %209 = vector.shape_cast %208 : vector<16xf32> to vector<16x1xf32>
    %cst_119 = arith.constant 3.125000e-02 : f32
    %210 = vector.broadcast %cst_119 : f32 to vector<16x1xf32>
    %211 = arith.mulf %209, %210 : vector<16x1xf32>
    %cst_120 = arith.constant 9.99999974E-6 : f32
    %212 = vector.broadcast %cst_120 : f32 to vector<16x1xf32>
    %213 = arith.addf %211, %212 : vector<16x1xf32>
    %214 = math.rsqrt %213 : vector<16x1xf32>
    %215 = vector.broadcast %214 : vector<16x1xf32> to vector<16x128xf32>
    %216 = arith.mulf %206, %215 : vector<16x128xf32>
    %c0_121 = arith.constant 0 : index
    %c0_122 = arith.constant 0 : index
    %217 = vector.load %arg13[%c0_121, %c0_122] : memref<16x128xf32, #tpu.memory_space<vmem>>, vector<16x128xf32>
    tpu.vector_store %arg13[%c0_121, %c0_122], %216 {strides = array<i32>} : memref<16x128xf32, #tpu.memory_space<vmem>>, vector<16x128xf32>,
    %c1_i32_123 = arith.constant 1 : i32
    %218 = arith.cmpi eq, %arg1, %c1_i32_123 : i32
    %219 = arith.extui %218 : i1 to i32
    %c0_i32_124 = arith.constant 0 : i32
    %220 = arith.cmpi ne, %219, %c0_i32_124 : i32
    scf.if %220 {
      %221 = vector.extract_strided_slice %216 {offsets = [0, 0], sizes = [8, 128], strides = [1, 1]} : vector<16x128xf32> to vector<8x128xf32>
      %222 = arith.truncf %221 : vector<8x128xf32> to vector<8x128xbf16>
      %c0_125 = arith.constant 0 : index
      %c0_126 = arith.constant 0 : index
      %223 = vector.load %arg10[%c0_125, %c0_126] : memref<128x128xbf16, #tpu.memory_space<vmem>>, vector<128x128xbf16>
      %cst_127 = arith.constant dense<0.000000e+00> : vector<8x128xf32>
      %224 = tpu.matmul %222, %223, %cst_127 {dimension_numbers = #tpu.dot_dimension_numbers<[1], [0], [0], [1], [0, 0, 1, 1], [], []>} : vector<8x128xbf16>, vector<128x128xbf16>, vector<8x128xf32> -> vector<8x128xf32>
      %225 = vector.extract_strided_slice %224 {offsets = [0, 0], sizes = [1, 128], strides = [1, 1]} : vector<8x128xf32> to vector<1x128xf32>
      %c0_128 = arith.constant 0 : index
      %c0_129 = arith.constant 0 : index
      %226 = vector.load %arg11[%c0_128, %c0_129] : memref<1x128xf32, #tpu.memory_space<vmem>>, vector<1x128xf32>
      %227 = arith.addf %225, %226 : vector<1x128xf32>
      %c0_130 = arith.constant 0 : index
      %c0_131 = arith.constant 0 : index
      %c0_132 = arith.constant 0 : index
      %228 = vector.load %arg12[%c0_130, %c0_131, %c0_132] : memref<1x1x128xf32, #tpu.memory_space<vmem>>, vector<1x1x128xf32>
      %229 = vector.shape_cast %228 : vector<1x1x128xf32> to vector<1x128xf32>
      %230 = vector.shape_cast %227 : vector<1x128xf32> to vector<1x1x128xf32>
      tpu.vector_store %arg12[%c0_130, %c0_131, %c0_132], %230 {strides = array<i32>} : memref<1x1x128xf32, #tpu.memory_space<vmem>>, vector<1x1x128xf32>,
    } else {
    }
    return
  }
  func.func @transform_0(%arg0: i32, %arg1: i32, %arg2: memref<2xi32, #tpu.memory_space<smem>>) -> (i32, i32, i32) {
    %c0_i32 = arith.constant 0 : i32
    %c0_i32_0 = arith.constant 0 : i32
    %c0_i32_1 = arith.constant 0 : i32
    return %arg0, %c0_i32, %c0_i32_0 : i32, i32, i32
  }
  func.func @transform_1(%arg0: i32, %arg1: i32, %arg2: memref<2xi32, #tpu.memory_space<smem>>) -> (i32, i32, i32, i32) {
    %c0_i32 = arith.constant 0 : i32
    %c0_i32_0 = arith.constant 0 : i32
    %c0_i32_1 = arith.constant 0 : i32
    %c0_i32_2 = arith.constant 0 : i32
    return %arg1, %c0_i32, %c0_i32_0, %c0_i32_1 : i32, i32, i32, i32
  }
  func.func @transform_2(%arg0: i32, %arg1: i32, %arg2: memref<2xi32, #tpu.memory_space<smem>>) -> (i32, i32, i32, i32) {
    %c0_i32 = arith.constant 0 : i32
    %c0_i32_0 = arith.constant 0 : i32
    %c0_i32_1 = arith.constant 0 : i32
    %c0_i32_2 = arith.constant 0 : i32
    return %arg1, %c0_i32, %c0_i32_0, %c0_i32_1 : i32, i32, i32, i32
  }
  func.func @transform_3(%arg0: i32, %arg1: i32, %arg2: memref<2xi32, #tpu.memory_space<smem>>) -> (i32, i32, i32) {
    %c0_i32 = arith.constant 0 : i32
    %c0_i32_0 = arith.constant 0 : i32
    %c0_i32_1 = arith.constant 0 : i32
    return %arg1, %c0_i32, %c0_i32_0 : i32, i32, i32
  }
  func.func @transform_4(%arg0: i32, %arg1: i32, %arg2: memref<2xi32, #tpu.memory_space<smem>>) -> (i32, i32, i32) {
    %c0_i32 = arith.constant 0 : i32
    %c0_i32_0 = arith.constant 0 : i32
    %c0_i32_1 = arith.constant 0 : i32
    return %arg1, %c0_i32, %c0_i32_0 : i32, i32, i32
  }
  func.func @transform_5(%arg0: i32, %arg1: i32, %arg2: memref<2xi32, #tpu.memory_space<smem>>) -> (i32, i32, i32) {
    %c0_i32 = arith.constant 0 : i32
    %c0_i32_0 = arith.constant 0 : i32
    %c0_i32_1 = arith.constant 0 : i32
    return %arg1, %c0_i32, %c0_i32_0 : i32, i32, i32
  }
  func.func @transform_6(%arg0: i32, %arg1: i32, %arg2: memref<2xi32, #tpu.memory_space<smem>>) -> (i32, i32, i32) {
    %c0_i32 = arith.constant 0 : i32
    %c0_i32_0 = arith.constant 0 : i32
    %c0_i32_1 = arith.constant 0 : i32
    return %arg1, %c0_i32, %c0_i32_0 : i32, i32, i32
  }
  func.func @transform_7(%arg0: i32, %arg1: i32, %arg2: memref<2xi32, #tpu.memory_space<smem>>) -> (i32, i32) {
    %c0_i32 = arith.constant 0 : i32
    %c0_i32_0 = arith.constant 0 : i32
    %c0_i32_1 = arith.constant 0 : i32
    return %c0_i32, %c0_i32_0 : i32, i32
  }
  func.func @transform_8(%arg0: i32, %arg1: i32, %arg2: memref<2xi32, #tpu.memory_space<smem>>) -> (i32, i32) {
    %c0_i32 = arith.constant 0 : i32
    %c0_i32_0 = arith.constant 0 : i32
    %c0_i32_1 = arith.constant 0 : i32
    return %c0_i32, %c0_i32_0 : i32, i32
  }
  func.func @transform_9(%arg0: i32, %arg1: i32, %arg2: memref<2xi32, #tpu.memory_space<smem>>) -> (i32, i32, i32) {
    %c0_i32 = arith.constant 0 : i32
    %c0_i32_0 = arith.constant 0 : i32
    %c0_i32_1 = arith.constant 0 : i32
    return %arg0, %c0_i32, %c0_i32_0 : i32, i32, i32
  }
}

</mosaic_0001>

<llo_original>
// kernel: node_layer_transformer_forward.1
$region0: #{node_layer_transformer_forward.1}
  #allocation0 [shape = 'u32[]', space=smem, size = 0x4, offset = 0x4, fixed_abs, tag = 'smem constant byte address 0x4 - core index']
  #allocation1 [shape = 'u32[144,128]{1,0:T(1,128)}', space=vmem, size = 0x12000, scoped, tag = 'internal scratch']
  #allocation2 [shape = 'f32[16,128]{1,0:T(8,128)}', space=vmem, size = 0x2000, scoped, tag = 'scratch operand']
  #allocation3 [shape = 's32[1]{0}', space=sflag, size = 0x4, scoped, tag = 'scoped memory for node_layer_transformer_forward.1']
  #allocation4 [shape = 'u8[512]{0}', space=smem, size = 0x200, scoped, tag = 'prefetched SMEM operand 0']
  %s0 = inlined_call_operand.vmem [shape: s32[2], index: 0, kind: input, shape index: {}]
  %s1 = inlined_call_operand.vmem [shape: f32[2,16,128], index: 1, kind: input, shape index: {}]
  %s2 = inlined_call_operand.vmem [shape: bf16[2,12,8,128], index: 2, kind: input, shape index: {}]
  %s3 = inlined_call_operand.vmem [shape: bf16[2,4,8,128], index: 3, kind: input, shape index: {}]
  %s4 = inlined_call_operand.vmem [shape: bf16[2,128,128], index: 4, kind: input, shape index: {}]
  %s5 = inlined_call_operand.vmem [shape: f32[2,1,128], index: 5, kind: input, shape index: {}]
  %s6 = inlined_call_operand.vmem [shape: bf16[2,128,128], index: 6, kind: input, shape index: {}]
  %s7 = inlined_call_operand.vmem [shape: f32[2,1,128], index: 7, kind: input, shape index: {}]
  %s8 = inlined_call_operand.vmem [shape: bf16[128,128], index: 8, kind: input, shape index: {}]
  %s9 = inlined_call_operand.vmem [shape: f32[1,128], index: 9, kind: input, shape index: {}]
  %s10 = inlined_call_operand.hbm [shape: f32[2,1,128], index: 10, kind: output, shape index: {}]
  %s11 = sld [smem:[#allocation0]]
  $region77: #{node_layer_transformer_forward.1} parent=0
    _
  %s13 = ssub.s32 1, %s11
  %s14 = scalar_select 0, %s13, %s11
  %s15 = sshll.u32 %s0, 4
  %s16 = int_to_ptr.vmem [resolvable:$true] %s15
  %18 = dma.vmem_to_smem %s16, 16, [#allocation4], [#allocation3]
  %19 = dma.done [#allocation3], 16
  %20 = sfence
  $region1: #{node_layer_transformer_forward.1} parent=0
    #allocation5 [shape = 'u8[1024]{0}', space=vmem, size = 0x400, scoped, tag = 'output window, operand 0']
    #allocation6 [shape = 's32[2]{0}', space=sflag, size = 0x8, scoped, tag = 'scoped memory for node_layer_transformer_forward.1']
    %21 = vsyncpa [#allocation6], 0
    %s22 = scalar_lea.sflag [#allocation6], 1
    %23 = vsyncpa %s22, 0
    loop: start=0, step=1, limit=6
    $region2: #{node_layer_transformer_forward.1} parent=1 // loop_pre_header
      _
    $region3: #{node_layer_transformer_forward.1} parent=1 // loop_header
      %s25 = sphi 0, %s29
      %p26 = scmp.ge.s32.totalorder %s25, 6
      %s32 = sphi 0, %s44
      %s33 = sphi 0, %s40
      %s34 = sphi 0, %s32
      %s35 = sphi 0, %s33
      %s36 = sphi 0, %s34
      %s37 = sphi 0, %s35
      %s47 = sphi 0, %s49
      %s50 = sphi 0, %s47
      %s51 = sphi 0, %s50
      %s67 = sphi 0, %s51
      %s73 = sphi 0, %s75
      %s76 = sphi 0, %s73
      %s77 = sphi 0, %s76
      %s93 = sphi 0, %s77
      %s99 = sphi 0, %s101
      %s102 = sphi 0, %s99
      %s103 = sphi 0, %s102
      %s119 = sphi 0, %s103
      %s125 = sphi 0, %s127
      %s128 = sphi 0, %s125
      %s129 = sphi 0, %s128
      %s145 = sphi 0, %s129
      %s151 = sphi 0, %s153
      %s154 = sphi 0, %s151
      %s155 = sphi 0, %s154
      %s171 = sphi 0, %s155
      %s177 = sphi 0, %s179
      %s180 = sphi 0, %s177
      %s181 = sphi 0, %s180
      %s197 = sphi 0, %s181
      %s203 = sphi 0, %s205
      %s206 = sphi 0, %s203
      %s207 = sphi 0, %s206
      %s223 = sphi 0, %s207
      %s227 = sphi 0, %s227
      %s229 = sphi 0, %s227
      %s230 = sphi 0, %s229
      %s244 = sphi 0, %s230
      %s248 = sphi 0, %s248
      %s250 = sphi 0, %s248
      %s251 = sphi 0, %s250
      %s265 = sphi 0, %s251
      %s271 = sphi 0, %s273
      %s274 = sphi 0, %s271
      %s275 = sphi 0, %s274
      %s291 = sphi 0, %s275
    $region4: #{node_layer_transformer_forward.1} parent=1 // loop_header_branch
      %28 = sbr.rel (%p26) target = $region8
    $region5: #{node_layer_transformer_forward.1} parent=1 // loop_body
      %s30 = ssub.s32 %s25, 1
      %s31 = ssub.s32 %s25, 2
      %s38 = sadd.s32 1, %s33
      %p39 = scmp.ge.s32.totalorder %s38, 2
      %s40 = scalar_select %p39, 0, %s38
      %s41 = sadd.s32 1, %s32
      %s42 = scalar_select %p39, %s41, %s32
      %p43 = scmp.ge.s32.totalorder %s42, 2
      %s44 = scalar_select %p43, 0, %s42
      %s45 = ssub.s32 %s32, %s44
      %p46 = scmp.eq.s32.totalorder %s45, 0
      %s48 = sadd.s32 %s47, 1
      %s49 = scalar_select %p46, %s47, %s48
      %p52 = pneg %p46
      %p53 = scmp.eq.s32.totalorder %s25, 3
      %p54 = por %p52, %p53
      %p55 = scmp.ne.s32.totalorder %s47, %s50
      %p56 = scmp.eq.s32.totalorder %s25, 0
      %p57 = por %p55, %p56
      %p58 = scmp.ne.s32.totalorder %s47, %s50
      %p59 = scmp.eq.s32.totalorder %s30, 3
      %p60 = por %p58, %p59
      %p61 = scmp.ne.s32.totalorder %s50, %s51
      %p62 = scmp.eq.s32.totalorder %s30, 0
      %p63 = por %p61, %p62
      %p64 = scmp.ne.s32.totalorder %s50, %s51
      %p65 = scmp.eq.s32.totalorder %s31, 3
      %p66 = por %p64, %p65
      %p68 = scmp.ne.s32.totalorder %s51, %s67
      %p69 = scmp.eq.s32.totalorder %s31, 0
      %p70 = por %p68, %p69
      %s71 = ssub.s32 %s33, %s40
      %p72 = scmp.eq.s32.totalorder %s71, 0
      %s74 = sadd.s32 %s73, 1
      %s75 = scalar_select %p72, %s73, %s74
      %p78 = pneg %p72
      %p79 = scmp.eq.s32.totalorder %s25, 3
      %p80 = por %p78, %p79
      %p81 = scmp.ne.s32.totalorder %s73, %s76
      %p82 = scmp.eq.s32.totalorder %s25, 0
      %p83 = por %p81, %p82
      %p84 = scmp.ne.s32.totalorder %s73, %s76
      %p85 = scmp.eq.s32.totalorder %s30, 3
      %p86 = por %p84, %p85
      %p87 = scmp.ne.s32.totalorder %s76, %s77
      %p88 = scmp.eq.s32.totalorder %s30, 0
      %p89 = por %p87, %p88
      %p90 = scmp.ne.s32.totalorder %s76, %s77
      %p91 = scmp.eq.s32.totalorder %s31, 3
      %p92 = por %p90, %p91
      %p94 = scmp.ne.s32.totalorder %s77, %s93
      %p95 = scmp.eq.s32.totalorder %s31, 0
      %p96 = por %p94, %p95
      %s97 = ssub.s32 %s33, %s40
      %p98 = scmp.eq.s32.totalorder %s97, 0
      %s100 = sadd.s32 %s99, 1
      %s101 = scalar_select %p98, %s99, %s100
      %p104 = pneg %p98
      %p105 = scmp.eq.s32.totalorder %s25, 3
      %p106 = por %p104, %p105
      %p107 = scmp.ne.s32.totalorder %s99, %s102
      %p108 = scmp.eq.s32.totalorder %s25, 0
      %p109 = por %p107, %p108
      %p110 = scmp.ne.s32.totalorder %s99, %s102
      %p111 = scmp.eq.s32.totalorder %s30, 3
      %p112 = por %p110, %p111
      %p113 = scmp.ne.s32.totalorder %s102, %s103
      %p114 = scmp.eq.s32.totalorder %s30, 0
      %p115 = por %p113, %p114
      %p116 = scmp.ne.s32.totalorder %s102, %s103
      %p117 = scmp.eq.s32.totalorder %s31, 3
      %p118 = por %p116, %p117
      %p120 = scmp.ne.s32.totalorder %s103, %s119
      %p121 = scmp.eq.s32.totalorder %s31, 0
      %p122 = por %p120, %p121
      %s123 = ssub.s32 %s33, %s40
      %p124 = scmp.eq.s32.totalorder %s123, 0
      %s126 = sadd.s32 %s125, 1
      %s127 = scalar_select %p124, %s125, %s126
      %p130 = pneg %p124
      %p131 = scmp.eq.s32.totalorder %s25, 3
      %p132 = por %p130, %p131
      %p133 = scmp.ne.s32.totalorder %s125, %s128
      %p134 = scmp.eq.s32.totalorder %s25, 0
      %p135 = por %p133, %p134
      %p136 = scmp.ne.s32.totalorder %s125, %s128
      %p137 = scmp.eq.s32.totalorder %s30, 3
      %p138 = por %p136, %p137
      %p139 = scmp.ne.s32.totalorder %s128, %s129
      %p140 = scmp.eq.s32.totalorder %s30, 0
      %p141 = por %p139, %p140
      %p142 = scmp.ne.s32.totalorder %s128, %s129
      %p143 = scmp.eq.s32.totalorder %s31, 3
      %p144 = por %p142, %p143
      %p146 = scmp.ne.s32.totalorder %s129, %s145
      %p147 = scmp.eq.s32.totalorder %s31, 0
      %p148 = por %p146, %p147
      %s149 = ssub.s32 %s33, %s40
      %p150 = scmp.eq.s32.totalorder %s149, 0
      %s152 = sadd.s32 %s151, 1
      %s153 = scalar_select %p150, %s151, %s152
      %p156 = pneg %p150
      %p157 = scmp.eq.s32.totalorder %s25, 3
      %p158 = por %p156, %p157
      %p159 = scmp.ne.s32.totalorder %s151, %s154
      %p160 = scmp.eq.s32.totalorder %s25, 0
      %p161 = por %p159, %p160
      %p162 = scmp.ne.s32.totalorder %s151, %s154
      %p163 = scmp.eq.s32.totalorder %s30, 3
      %p164 = por %p162, %p163
      %p165 = scmp.ne.s32.totalorder %s154, %s155
      %p166 = scmp.eq.s32.totalorder %s30, 0
      %p167 = por %p165, %p166
      %p168 = scmp.ne.s32.totalorder %s154, %s155
      %p169 = scmp.eq.s32.totalorder %s31, 3
      %p170 = por %p168, %p169
      %p172 = scmp.ne.s32.totalorder %s155, %s171
      %p173 = scmp.eq.s32.totalorder %s31, 0
      %p174 = por %p172, %p173
      %s175 = ssub.s32 %s33, %s40
      %p176 = scmp.eq.s32.totalorder %s175, 0
      %s178 = sadd.s32 %s177, 1
      %s179 = scalar_select %p176, %s177, %s178
      %p182 = pneg %p176
      %p183 = scmp.eq.s32.totalorder %s25, 3
      %p184 = por %p182, %p183
      %p185 = scmp.ne.s32.totalorder %s177, %s180
      %p186 = scmp.eq.s32.totalorder %s25, 0
      %p187 = por %p185, %p186
      %p188 = scmp.ne.s32.totalorder %s177, %s180
      %p189 = scmp.eq.s32.totalorder %s30, 3
      %p190 = por %p188, %p189
      %p191 = scmp.ne.s32.totalorder %s180, %s181
      %p192 = scmp.eq.s32.totalorder %s30, 0
      %p193 = por %p191, %p192
      %p194 = scmp.ne.s32.totalorder %s180, %s181
      %p195 = scmp.eq.s32.totalorder %s31, 3
      %p196 = por %p194, %p195
      %p198 = scmp.ne.s32.totalorder %s181, %s197
      %p199 = scmp.eq.s32.totalorder %s31, 0
      %p200 = por %p198, %p199
      %s201 = ssub.s32 %s33, %s40
      %p202 = scmp.eq.s32.totalorder %s201, 0
      %s204 = sadd.s32 %s203, 1
      %s205 = scalar_select %p202, %s203, %s204
      %p208 = pneg %p202
      %p209 = scmp.eq.s32.totalorder %s25, 3
      %p210 = por %p208, %p209
      %p211 = scmp.ne.s32.totalorder %s203, %s206
      %p212 = scmp.eq.s32.totalorder %s25, 0
      %p213 = por %p211, %p212
      %p214 = scmp.ne.s32.totalorder %s203, %s206
      %p215 = scmp.eq.s32.totalorder %s30, 3
      %p216 = por %p214, %p215
      %p217 = scmp.ne.s32.totalorder %s206, %s207
      %p218 = scmp.eq.s32.totalorder %s30, 0
      %p219 = por %p217, %p218
      %p220 = scmp.ne.s32.totalorder %s206, %s207
      %p221 = scmp.eq.s32.totalorder %s31, 3
      %p222 = por %p220, %p221
      %p224 = scmp.ne.s32.totalorder %s207, %s223
      %p225 = scmp.eq.s32.totalorder %s31, 0
      %p226 = por %p224, %p225
      %s228 = sadd.s32 %s227, 1
      %p231 = scmp.eq.s32.totalorder %s25, 3
      %p232 = scmp.ne.s32.totalorder %s227, %s229
      %p233 = scmp.eq.s32.totalorder %s25, 0
      %p234 = por %p232, %p233
      %p235 = scmp.ne.s32.totalorder %s227, %s229
      %p236 = scmp.eq.s32.totalorder %s30, 3
      %p237 = por %p235, %p236
      %p238 = scmp.ne.s32.totalorder %s229, %s230
      %p239 = scmp.eq.s32.totalorder %s30, 0
      %p240 = por %p238, %p239
      %p241 = scmp.ne.s32.totalorder %s229, %s230
      %p242 = scmp.eq.s32.totalorder %s31, 3
      %p243 = por %p241, %p242
      %p245 = scmp.ne.s32.totalorder %s230, %s244
      %p246 = scmp.eq.s32.totalorder %s31, 0
      %p247 = por %p245, %p246
      %s249 = sadd.s32 %s248, 1
      %p252 = scmp.eq.s32.totalorder %s25, 3
      %p253 = scmp.ne.s32.totalorder %s248, %s250
      %p254 = scmp.eq.s32.totalorder %s25, 0
      %p255 = por %p253, %p254
      %p256 = scmp.ne.s32.totalorder %s248, %s250
      %p257 = scmp.eq.s32.totalorder %s30, 3
      %p258 = por %p256, %p257
      %p259 = scmp.ne.s32.totalorder %s250, %s251
      %p260 = scmp.eq.s32.totalorder %s30, 0
      %p261 = por %p259, %p260
      %p262 = scmp.ne.s32.totalorder %s250, %s251
      %p263 = scmp.eq.s32.totalorder %s31, 3
      %p264 = por %p262, %p263
      %p266 = scmp.ne.s32.totalorder %s251, %s265
      %p267 = scmp.eq.s32.totalorder %s31, 0
      %p268 = por %p266, %p267
      %s269 = ssub.s32 %s32, %s44
      %p270 = scmp.eq.s32.totalorder %s269, 0
      %s272 = sadd.s32 %s271, 1
      %s273 = scalar_select %p270, %s271, %s272
      %p276 = pneg %p270
      %p277 = scmp.eq.s32.totalorder %s25, 3
      %p278 = por %p276, %p277
      %p279 = scmp.ne.s32.totalorder %s271, %s274
      %p280 = scmp.eq.s32.totalorder %s25, 0
      %p281 = por %p279, %p280
      %p282 = scmp.ne.s32.totalorder %s271, %s274
      %p283 = scmp.eq.s32.totalorder %s30, 3
      %p284 = por %p282, %p283
      %p285 = scmp.ne.s32.totalorder %s274, %s275
      %p286 = scmp.eq.s32.totalorder %s30, 0
      %p287 = por %p285, %p286
      %p288 = scmp.ne.s32.totalorder %s274, %s275
      %p289 = scmp.eq.s32.totalorder %s31, 3
      %p290 = por %p288, %p289
      %p292 = scmp.ne.s32.totalorder %s275, %s291
      %p293 = scmp.eq.s32.totalorder %s31, 0
      %p294 = por %p292, %p293
      %p295 = scmp.le.s32.totalorder 1, %s25
      %p296 = scmp.lt.s32.totalorder %s25, 5
      %p297 = pnand %p295, %p296
      %p298 = pneg %p297
      // Predicated region
      $region9: #{node_layer_transformer_forward.1} parent=5 // pred_check
        _
      $region10: #{node_layer_transformer_forward.1} parent=5 // pred_check_branch
        %300 = sbr.rel (%p297) target = $region12
      $region11: #{node_layer_transformer_forward.1} parent=5 // pred_region
        %s301 = ssub.s32 %s25, 1
        // Predicated region
        $region13: #{node_layer_transformer_forward.1} parent=11 // pred_check
          %p302 = pneg %p240
        $region14: #{node_layer_transformer_forward.1} parent=11 // pred_check_branch
          %304 = sbr.rel (%p302) target = $region16
        $region15: #{node_layer_transformer_forward.1} parent=11 // pred_region
          _
        $region16: #{node_layer_transformer_forward.1} parent=11 // pred_fallthru
          _
        // Predicated region
        $region17: #{node_layer_transformer_forward.1} parent=11 // pred_check
          %p305 = pneg %p261
        $region18: #{node_layer_transformer_forward.1} parent=11 // pred_check_branch
          %307 = sbr.rel (%p305) target = $region20
        $region19: #{node_layer_transformer_forward.1} parent=11 // pred_region
          _
        $region20: #{node_layer_transformer_forward.1} parent=11 // pred_fallthru
          _
      $region12: #{node_layer_transformer_forward.1} parent=5 // pred_fallthru
        _
      %p308 = scmp.lt.s32.totalorder %s25, 4
      // Predicated region
      $region21: #{node_layer_transformer_forward.1} parent=5 // pred_check
        %p309 = pneg %p308
      $region22: #{node_layer_transformer_forward.1} parent=5 // pred_check_branch
        %311 = sbr.rel (%p309) target = $region24
      $region23: #{node_layer_transformer_forward.1} parent=5 // pred_region
        // Predicated region
        $region25: #{node_layer_transformer_forward.1} parent=23 // pred_check
          %p312 = pneg %p57
        $region26: #{node_layer_transformer_forward.1} parent=23 // pred_check_branch
          %314 = sbr.rel (%p312) target = $region28
        $region27: #{node_layer_transformer_forward.1} parent=23 // pred_region
          %p315 = scmp.lt.s32.totalorder %s32, 1
          %s316 = scalar_select %p315, %s32, 1
          %s317 = smul.addr %s316, 2
          %s318 = smul.addr %s317, 8
          %s319 = scalar_lea.vmem %s1, %s318
        $region28: #{node_layer_transformer_forward.1} parent=23 // pred_fallthru
          _
        // Predicated region
        $region29: #{node_layer_transformer_forward.1} parent=23 // pred_check
          %p320 = pneg %p83
        $region30: #{node_layer_transformer_forward.1} parent=23 // pred_check_branch
          %322 = sbr.rel (%p320) target = $region32
        $region31: #{node_layer_transformer_forward.1} parent=23 // pred_region
          %p323 = scmp.lt.s32.totalorder %s33, 1
          %s324 = scalar_select %p323, %s33, 1
          %s325 = smul.addr %s324, 12
          %s326 = smul.addr %s325, 4
          %s327 = scalar_lea.vmem %s2, %s326
        $region32: #{node_layer_transformer_forward.1} parent=23 // pred_fallthru
          _
        // Predicated region
        $region33: #{node_layer_transformer_forward.1} parent=23 // pred_check
          %p328 = pneg %p109
        $region34: #{node_layer_transformer_forward.1} parent=23 // pred_check_branch
          %330 = sbr.rel (%p328) target = $region36
        $region35: #{node_layer_transformer_forward.1} parent=23 // pred_region
          %p331 = scmp.lt.s32.totalorder %s33, 1
          %s332 = scalar_select %p331, %s33, 1
          %s333 = smul.addr %s332, 4
          %s334 = smul.addr %s333, 4
          %s335 = scalar_lea.vmem %s3, %s334
        $region36: #{node_layer_transformer_forward.1} parent=23 // pred_fallthru
          _
        // Predicated region
        $region37: #{node_layer_transformer_forward.1} parent=23 // pred_check
          %p336 = pneg %p135
        $region38: #{node_layer_transformer_forward.1} parent=23 // pred_check_branch
          %338 = sbr.rel (%p336) target = $region40
        $region39: #{node_layer_transformer_forward.1} parent=23 // pred_region
          %p339 = scmp.lt.s32.totalorder %s33, 1
          %s340 = scalar_select %p339, %s33, 1
          %s341 = smul.addr %s340, 16
          %s342 = smul.addr %s341, 4
          %s343 = scalar_lea.vmem %s4, %s342
        $region40: #{node_layer_transformer_forward.1} parent=23 // pred_fallthru
          _
        // Predicated region
        $region41: #{node_layer_transformer_forward.1} parent=23 // pred_check
          %p344 = pneg %p161
        $region42: #{node_layer_transformer_forward.1} parent=23 // pred_check_branch
          %346 = sbr.rel (%p344) target = $region44
        $region43: #{node_layer_transformer_forward.1} parent=23 // pred_region
          %p347 = scmp.lt.s32.totalorder %s33, 1
          %s348 = scalar_select %p347, %s33, 1
          %s349 = scalar_lea.vmem %s5, %s348
        $region44: #{node_layer_transformer_forward.1} parent=23 // pred_fallthru
          _
        // Predicated region
        $region45: #{node_layer_transformer_forward.1} parent=23 // pred_check
          %p350 = pneg %p187
        $region46: #{node_layer_transformer_forward.1} parent=23 // pred_check_branch
          %352 = sbr.rel (%p350) target = $region48
        $region47: #{node_layer_transformer_forward.1} parent=23 // pred_region
          %p353 = scmp.lt.s32.totalorder %s33, 1
          %s354 = scalar_select %p353, %s33, 1
          %s355 = smul.addr %s354, 16
          %s356 = smul.addr %s355, 4
          %s357 = scalar_lea.vmem %s6, %s356
        $region48: #{node_layer_transformer_forward.1} parent=23 // pred_fallthru
          _
        // Predicated region
        $region49: #{node_layer_transformer_forward.1} parent=23 // pred_check
          %p358 = pneg %p213
        $region50: #{node_layer_transformer_forward.1} parent=23 // pred_check_branch
          %360 = sbr.rel (%p358) target = $region52
        $region51: #{node_layer_transformer_forward.1} parent=23 // pred_region
          %p361 = scmp.lt.s32.totalorder %s33, 1
          %s362 = scalar_select %p361, %s33, 1
          %s363 = scalar_lea.vmem %s7, %s362
        $region52: #{node_layer_transformer_forward.1} parent=23 // pred_fallthru
          _
      $region24: #{node_layer_transformer_forward.1} parent=5 // pred_fallthru
        _
      %p364 = scmp.le.s32.totalorder 1, %s25
      %p365 = scmp.lt.s32.totalorder %s25, 5
      %p366 = pnand %p364, %p365
      %p367 = pneg %p366
      // Predicated region
      $region53: #{node_layer_transformer_forward.1} parent=5 // pred_check
        _
      $region54: #{node_layer_transformer_forward.1} parent=5 // pred_check_branch
        %369 = sbr.rel (%p366) target = $region56
      $region55: #{node_layer_transformer_forward.1} parent=5 // pred_region
        %s370 = ssub.s32 %s25, 1
        %p371 = scmp.lt.s32.totalorder %s34, 1
        %s372 = scalar_select %p371, %s34, 1
        %s373 = smul.addr %s372, 2
        %s374 = smul.addr %s373, 8
        %s375 = scalar_lea.vmem %s1, %s374
        %p376 = pneg %p63
        %p377 = pneg %p60
        %p378 = scmp.lt.s32.totalorder %s35, 1
        %s379 = scalar_select %p378, %s35, 1
        %s380 = smul.addr %s379, 12
        %s381 = smul.addr %s380, 4
        %s382 = scalar_lea.vmem %s2, %s381
        %p383 = pneg %p89
        %p384 = pneg %p86
        %p385 = scmp.lt.s32.totalorder %s35, 1
        %s386 = scalar_select %p385, %s35, 1
        %s387 = smul.addr %s386, 4
        %s388 = smul.addr %s387, 4
        %s389 = scalar_lea.vmem %s3, %s388
        %p390 = pneg %p115
        %p391 = pneg %p112
        %p392 = scmp.lt.s32.totalorder %s35, 1
        %s393 = scalar_select %p392, %s35, 1
        %s394 = smul.addr %s393, 16
        %s395 = smul.addr %s394, 4
        %s396 = scalar_lea.vmem %s4, %s395
        %p397 = pneg %p141
        %p398 = pneg %p138
        %p399 = scmp.lt.s32.totalorder %s35, 1
        %s400 = scalar_select %p399, %s35, 1
        %s401 = scalar_lea.vmem %s5, %s400
        %p402 = pneg %p167
        %p403 = pneg %p164
        %p404 = scmp.lt.s32.totalorder %s35, 1
        %s405 = scalar_select %p404, %s35, 1
        %s406 = smul.addr %s405, 16
        %s407 = smul.addr %s406, 4
        %s408 = scalar_lea.vmem %s6, %s407
        %p409 = pneg %p193
        %p410 = pneg %p190
        %p411 = scmp.lt.s32.totalorder %s35, 1
        %s412 = scalar_select %p411, %s35, 1
        %s413 = scalar_lea.vmem %s7, %s412
        %p414 = pneg %p219
        %p415 = pneg %p216
        %p416 = pneg %p240
        %p417 = pneg %p237
        %p418 = pneg %p261
        %p419 = pneg %p258
        %p420 = pneg %p287
        %p421 = pneg %p284
        %s422 = sand.u32 %s274, 1
        %s423 = scalar_lea.sflag [#allocation6], %s422
        %s424 = sand.u32 %s274, 1
        %s425 = scalar_lea.vmem [#allocation5], %s424
        %p426 = scmp.lt.s32.totalorder %s34, 1
        %s427 = scalar_select %p426, %s34, 1
        %s428 = smul.addr %s427, 2
        %s429 = smul.addr %s428, 8
        %s430 = scalar_lea.vmem %s1, %s429
        %p431 = scmp.lt.s32.totalorder %s35, 1
        %s432 = scalar_select %p431, %s35, 1
        %s433 = smul.addr %s432, 12
        %s434 = smul.addr %s433, 4
        %s435 = scalar_lea.vmem %s2, %s434
        %p436 = scmp.lt.s32.totalorder %s35, 1
        %s437 = scalar_select %p436, %s35, 1
        %s438 = smul.addr %s437, 4
        %s439 = smul.addr %s438, 4
        %s440 = scalar_lea.vmem %s3, %s439
        %p441 = scmp.lt.s32.totalorder %s35, 1
        %s442 = scalar_select %p441, %s35, 1
        %s443 = smul.addr %s442, 16
        %s444 = smul.addr %s443, 4
        %s445 = scalar_lea.vmem %s4, %s444
        %p446 = scmp.lt.s32.totalorder %s35, 1
        %s447 = scalar_select %p446, %s35, 1
        %s448 = scalar_lea.vmem %s5, %s447
        %p449 = scmp.lt.s32.totalorder %s35, 1
        %s450 = scalar_select %p449, %s35, 1
        %s451 = smul.addr %s450, 16
        %s452 = smul.addr %s451, 4
        %s453 = scalar_lea.vmem %s6, %s452
        %p454 = scmp.lt.s32.totalorder %s35, 1
        %s455 = scalar_select %p454, %s35, 1
        %s456 = scalar_lea.vmem %s7, %s455
        %s458 = sld [smem:[#allocation4 + %s34]]
        %p459 = scmp.eq.s32.totalorder %s35, 0
        // Predicated region
        $region57: #{node_layer_transformer_forward.1} parent=55 // pred_check
          %p460 = pneg %p459
        $region58: #{node_layer_transformer_forward.1} parent=55 // pred_check_branch
          %462 = sbr.rel (%p460) target = $region60
        $region59: #{node_layer_transformer_forward.1} parent=55 // pred_region
          %v463 = vld [vmem:[%s430] sm:$0xff]
          %v464 = vld [vmem:[%s430 + $0x8] sm:$0xff]
          %465 = vst [vmem:[#allocation2] sm:$0xff] %v463
          %466 = vst [vmem:[#allocation2 + $0x8] sm:$0xff] %v464
        $region60: #{node_layer_transformer_forward.1} parent=55 // pred_fallthru
          _
        %v467 = vld [vmem:[#allocation2] sm:$0xff]
        %v468 = vld [vmem:[#allocation2 + $0x8] sm:$0xff]
        %v469 = vpack.c.bf16 %v468, %v467
        %v470 = vlaneseq
        %v471 = vshrl.u32 %v470, 7
        %v472 = vadd.s32 %v471, 8
        %v473 = vlaneseq
        %v474 = vand.u32 %v473, 127
        %vm475 = vcmp.gt.s32.totalorder %v474, %v471
        %vm476 = vcmp.gt.s32.totalorder %v474, %v472
        %s477 = sadd.s32 %s458, 1
        %v478 = vstv %s477
        %vm479 = vcmp.ge.s32.totalorder %v474, %v478
        %vm480 = vmor %vm475, %vm479
        %vm481 = vmor %vm476, %vm479
        %v482 = vld [vmem:[%s435] sm:$0xf]
        %s483 = scalar_lea.vmem %s435, 16
        %v484 = vld [vmem:[%s483] sm:$0xf]
        %s485 = scalar_lea.vmem %s435, 32
        %v486 = vld [vmem:[%s485] sm:$0xf]
        %487 = vmatprep.subr.bf16.mxu0 0
        %488 = vmatpush1.bf16.xpose.msra.mxu0 0
        %489 = vmatprep.subr.bf16.mxu0 0
        %490 = vmatpush1.bf16.xpose.msra.mxu0 0
        %491 = vmatprep.subr.bf16.mxu0 0
        %492 = vmatpush1.bf16.xpose.msra.mxu0 0
        %493 = vmatprep.subr.bf16.mxu0 0
        %494 = vmatpush1.bf16.xpose.msra.mxu0 0
        %495 = vmatprep.subr.bf16.mxu0 0
        %496 = vmatpush1.bf16.xpose.msra.mxu0 0
        %497 = vmatprep.subr.bf16.mxu0 0
        %498 = vmatpush1.bf16.xpose.msra.mxu0 0
        %499 = vmatprep.subr.bf16.mxu0 0
        %500 = vmatpush1.bf16.xpose.msra.mxu0 0
        %501 = vmatprep.subr.bf16.mxu0 0
        %502 = vmatpush1.bf16.xpose.msra.mxu0 %v482
        %503 = vmatprep.subr.bf16.mxu0 0
        %504 = vmatpush2.bf16.xpose.msra.mxu0 0
        %505 = vmatprep.subr.bf16.mxu0 0
        %506 = vmatpush2.bf16.xpose.msra.mxu0 0
        %507 = vmatprep.subr.bf16.mxu0 0
        %508 = vmatpush2.bf16.xpose.msra.mxu0 0
        %509 = vmatprep.subr.bf16.mxu0 0
        %510 = vmatpush2.bf16.xpose.msra.mxu0 0
        %511 = vmatprep.subr.bf16.mxu0 0
        %512 = vmatpush2.bf16.xpose.msra.mxu0 0
        %513 = vmatprep.subr.bf16.mxu0 0
        %514 = vmatpush2.bf16.xpose.msra.mxu0 0
        %515 = vmatprep.subr.bf16.mxu0 0
        %516 = vmatpush2.bf16.xpose.msra.mxu0 0
        %517 = vmatprep.subr.bf16.mxu0 0
        %518 = vmatpush2.bf16.xpose.msra.mxu0 0
        %519 = vmatprep.mubr.bf16.mxu0 0
        %520 = vmatmul.mubr.bf16.gmra.mxu0 %v469
        %v521 = vpop.f32.mrf.mxu0
        %v522 = vadd.f32 0.0, %v521
        %v523 = vpop.f32.mrf.mxu0
        %v524 = vpop.f32.mrf.mxu0
        %v525 = vadd.f32 0.0, %v524
        %v526 = vpop.f32.mrf.mxu0
        %527 = vdwg.mxu0
        %528 = vmatprep.subr.bf16.mxu0 0
        %529 = vmatpush1.bf16.xpose.msra.mxu0 0
        %530 = vmatprep.subr.bf16.mxu0 0
        %531 = vmatpush1.bf16.xpose.msra.mxu0 0
        %532 = vmatprep.subr.bf16.mxu0 0
        %533 = vmatpush1.bf16.xpose.msra.mxu0 0
        %534 = vmatprep.subr.bf16.mxu0 0
        %535 = vmatpush1.bf16.xpose.msra.mxu0 0
        %536 = vmatprep.subr.bf16.mxu0 0
        %537 = vmatpush1.bf16.xpose.msra.mxu0 0
        %538 = vmatprep.subr.bf16.mxu0 0
        %539 = vmatpush1.bf16.xpose.msra.mxu0 0
        %540 = vmatprep.subr.bf16.mxu0 0
        %541 = vmatpush1.bf16.xpose.msra.mxu0 0
        %542 = vmatprep.subr.bf16.mxu0 0
        %543 = vmatpush1.bf16.xpose.msra.mxu0 %v484
        %544 = vmatprep.subr.bf16.mxu0 0
        %545 = vmatpush2.bf16.xpose.msra.mxu0 0
        %546 = vmatprep.subr.bf16.mxu0 0
        %547 = vmatpush2.bf16.xpose.msra.mxu0 0
        %548 = vmatprep.subr.bf16.mxu0 0
        %549 = vmatpush2.bf16.xpose.msra.mxu0 0
        %550 = vmatprep.subr.bf16.mxu0 0
        %551 = vmatpush2.bf16.xpose.msra.mxu0 0
        %552 = vmatprep.subr.bf16.mxu0 0
        %553 = vmatpush2.bf16.xpose.msra.mxu0 0
        %554 = vmatprep.subr.bf16.mxu0 0
        %555 = vmatpush2.bf16.xpose.msra.mxu0 0
        %556 = vmatprep.subr.bf16.mxu0 0
        %557 = vmatpush2.bf16.xpose.msra.mxu0 0
        %558 = vmatprep.subr.bf16.mxu0 0
        %559 = vmatpush2.bf16.xpose.msra.mxu0 0
        %560 = vmatprep.mubr.bf16.mxu0 0
        %561 = vmatmul.mubr.bf16.gmra.mxu0 %v469
        %v562 = vpop.f32.mrf.mxu0
        %v563 = vadd.f32 0.0, %v562
        %v564 = vpop.f32.mrf.mxu0
        %v565 = vpop.f32.mrf.mxu0
        %v566 = vadd.f32 0.0, %v565
        %v567 = vpop.f32.mrf.mxu0
        %568 = vdwg.mxu0
        %569 = vmatprep.subr.bf16.mxu0 0
        %570 = vmatpush1.bf16.xpose.msra.mxu0 0
        %571 = vmatprep.subr.bf16.mxu0 0
        %572 = vmatpush1.bf16.xpose.msra.mxu0 0
        %573 = vmatprep.subr.bf16.mxu0 0
        %574 = vmatpush1.bf16.xpose.msra.mxu0 0
        %575 = vmatprep.subr.bf16.mxu0 0
        %576 = vmatpush1.bf16.xpose.msra.mxu0 0
        %577 = vmatprep.subr.bf16.mxu0 0
        %578 = vmatpush1.bf16.xpose.msra.mxu0 0
        %579 = vmatprep.subr.bf16.mxu0 0
        %580 = vmatpush1.bf16.xpose.msra.mxu0 0
        %581 = vmatprep.subr.bf16.mxu0 0
        %582 = vmatpush1.bf16.xpose.msra.mxu0 0
        %583 = vmatprep.subr.bf16.mxu0 0
        %584 = vmatpush1.bf16.xpose.msra.mxu0 %v486
        %585 = vmatprep.subr.bf16.mxu0 0
        %586 = vmatpush2.bf16.xpose.msra.mxu0 0
        %587 = vmatprep.subr.bf16.mxu0 0
        %588 = vmatpush2.bf16.xpose.msra.mxu0 0
        %589 = vmatprep.subr.bf16.mxu0 0
        %590 = vmatpush2.bf16.xpose.msra.mxu0 0
        %591 = vmatprep.subr.bf16.mxu0 0
        %592 = vmatpush2.bf16.xpose.msra.mxu0 0
        %593 = vmatprep.subr.bf16.mxu0 0
        %594 = vmatpush2.bf16.xpose.msra.mxu0 0
        %595 = vmatprep.subr.bf16.mxu0 0
        %596 = vmatpush2.bf16.xpose.msra.mxu0 0
        %597 = vmatprep.subr.bf16.mxu0 0
        %598 = vmatpush2.bf16.xpose.msra.mxu0 0
        %599 = vmatprep.subr.bf16.mxu0 0
        %600 = vmatpush2.bf16.xpose.msra.mxu0 0
        %601 = vmatprep.mubr.bf16.mxu0 0
        %602 = vmatmul.mubr.bf16.gmra.mxu0 %v469
        %v603 = vpop.f32.mrf.mxu0
        %v604 = vadd.f32 0.0, %v603
        %v605 = vpop.f32.mrf.mxu0
        %v606 = vpop.f32.mrf.mxu0
        %v607 = vadd.f32 0.0, %v606
        %v608 = vpop.f32.mrf.mxu0
        %609 = vdwg.mxu0
        %v610 = vpack.c.bf16 %v525, %v522
        %v611 = vpack.c.bf16 %v566, %v563
        %vm612 = vcmask 64512
        %v614 = vsel %vm612, %v610, 0
        %v617 = vsel %vm612, %v611, 0
        %619 = vmatprep.subr.bf16.mxu0 0
        %620 = vmatpush1.bf16.xpose.msra.mxu0 0
        %621 = vmatprep.subr.bf16.mxu0 0
        %622 = vmatpush1.bf16.xpose.msra.mxu0 0
        %623 = vmatprep.subr.bf16.mxu0 0
        %624 = vmatpush1.bf16.xpose.msra.mxu0 0
        %625 = vmatprep.subr.bf16.mxu0 0
        %626 = vmatpush1.bf16.xpose.msra.mxu0 0
        %627 = vmatprep.subr.bf16.mxu0 0
        %628 = vmatpush1.bf16.xpose.msra.mxu0 0
        %629 = vmatprep.subr.bf16.mxu0 0
        %630 = vmatpush1.bf16.xpose.msra.mxu0 0
        %631 = vmatprep.subr.bf16.mxu0 0
        %632 = vmatpush1.bf16.xpose.msra.mxu0 0
        %633 = vmatprep.subr.bf16.mxu0 0
        %634 = vmatpush1.bf16.xpose.msra.mxu0 %v617
        %635 = vmatprep.subr.bf16.mxu0 0
        %636 = vmatpush2.bf16.xpose.msra.mxu0 0
        %637 = vmatprep.subr.bf16.mxu0 0
        %638 = vmatpush2.bf16.xpose.msra.mxu0 0
        %639 = vmatprep.subr.bf16.mxu0 0
        %640 = vmatpush2.bf16.xpose.msra.mxu0 0
        %641 = vmatprep.subr.bf16.mxu0 0
        %642 = vmatpush2.bf16.xpose.msra.mxu0 0
        %643 = vmatprep.subr.bf16.mxu0 0
        %644 = vmatpush2.bf16.xpose.msra.mxu0 0
        %645 = vmatprep.subr.bf16.mxu0 0
        %646 = vmatpush2.bf16.xpose.msra.mxu0 0
        %647 = vmatprep.subr.bf16.mxu0 0
        %648 = vmatpush2.bf16.xpose.msra.mxu0 0
        %649 = vmatprep.subr.bf16.mxu0 0
        %650 = vmatpush2.bf16.xpose.msra.mxu0 0
        %651 = vmatprep.mubr.bf16.mxu0 0
        %652 = vmatmul.mubr.bf16.gmra.mxu0 %v614
        %v653 = vpop.f32.mrf.mxu0
        %v654 = vadd.f32 0.0, %v653
        %v655 = vpop.f32.mrf.mxu0
        %v656 = vpop.f32.mrf.mxu0
        %v657 = vadd.f32 0.0, %v656
        %v658 = vpop.f32.mrf.mxu0
        %659 = vdwg.mxu0
        %v660 = vmul.f32 %v654, 0.35355338
        %v661 = vmul.f32 %v657, 0.35355338
        %v662 = vsel %vm480, -1e+30, %v660
        %v663 = vsel %vm481, -1e+30, %v661
        %vm664 = vcmask 130048
        %v665 = vsel %vm664, %v662, -inf
        %666 = vmax.xlane.f32.xlu0 %v665
        %v667 = vpop.xlane.xlu0 %666
        %v668 = vsel %vm664, %v663, -inf
        %669 = vmax.xlane.f32.xlu0 %v668
        %v670 = vpop.xlane.xlu0 %669
        %v671 = vsub.f32 %v662, %v667
        %v672 = vsub.f32 %v663, %v670
        %v673 = vmul.f32 %v671, 1.442695
        %v674 = vpow.pop %v673
        %v675 = vmul.f32 %v672, 1.442695
        %v676 = vpow.pop %v675
        %v677 = vsel %vm664, %v674, 0.0
        %678 = vadd.xlane.f32.xlu0 %v677
        %v679 = vpop.xlane.xlu0 %678
        %v680 = vsel %vm664, %v676, 0.0
        %681 = vadd.xlane.f32.xlu0 %v680
        %v682 = vpop.xlane.xlu0 %681
        %v683 = vrcp.pop %v679
        %v684 = vrcp.pop %v682
        %v685 = vmul.f32 %v674, %v683
        %v686 = vmul.f32 %v676, %v684
        %v687 = vpack.c.bf16 %v686, %v685
        %v688 = vpack.c.bf16 %v607, %v604
        %v690 = vsel %vm664, %v687, 0
        %692 = vmatprep.subr.bf16.mxu0 0
        %693 = vmatpush1.bf16.msra.mxu0 0
        %694 = vmatprep.subr.bf16.mxu0 0
        %695 = vmatpush1.bf16.msra.mxu0 0
        %696 = vmatprep.subr.bf16.mxu0 0
        %697 = vmatpush1.bf16.msra.mxu0 0
        %698 = vmatprep.subr.bf16.mxu0 0
        %699 = vmatpush1.bf16.msra.mxu0 0
        %700 = vmatprep.subr.bf16.mxu0 0
        %701 = vmatpush1.bf16.msra.mxu0 0
        %702 = vmatprep.subr.bf16.mxu0 0
        %703 = vmatpush1.bf16.msra.mxu0 0
        %704 = vmatprep.subr.bf16.mxu0 0
        %705 = vmatpush1.bf16.msra.mxu0 0
        %706 = vmatprep.subr.bf16.mxu0 0
        %707 = vmatpush1.bf16.msra.mxu0 %v688
        %708 = vmatprep.subr.bf16.mxu0 0
        %709 = vmatpush2.bf16.msra.mxu0 0
        %710 = vmatprep.subr.bf16.mxu0 0
        %711 = vmatpush2.bf16.msra.mxu0 0
        %712 = vmatprep.subr.bf16.mxu0 0
        %713 = vmatpush2.bf16.msra.mxu0 0
        %714 = vmatprep.subr.bf16.mxu0 0
        %715 = vmatpush2.bf16.msra.mxu0 0
        %716 = vmatprep.subr.bf16.mxu0 0
        %717 = vmatpush2.bf16.msra.mxu0 0
        %718 = vmatprep.subr.bf16.mxu0 0
        %719 = vmatpush2.bf16.msra.mxu0 0
        %720 = vmatprep.subr.bf16.mxu0 0
        %721 = vmatpush2.bf16.msra.mxu0 0
        %722 = vmatprep.subr.bf16.mxu0 0
        %723 = vmatpush2.bf16.msra.mxu0 0
        %724 = vmatprep.mubr.bf16.mxu0 0
        %725 = vmatmul.mubr.bf16.gmra.mxu0 %v690
        %v726 = vpop.f32.mrf.mxu0
        %v727 = vadd.f32 0.0, %v726
        %v728 = vpop.f32.mrf.mxu0
        %v729 = vpop.f32.mrf.mxu0
        %v730 = vadd.f32 0.0, %v729
        %v731 = vpop.f32.mrf.mxu0
        %732 = vdwg.mxu0
        %v733 = vpack.c.bf16 %v730, %v727
        %v734 = vld [vmem:[%s440] sm:$0xf]
        %s735 = scalar_lea.vmem %s435, 4
        %v736 = vld [vmem:[%s735] sm:$0xf]
        %s737 = scalar_lea.vmem %s435, 20
        %v738 = vld [vmem:[%s737] sm:$0xf]
        %s739 = scalar_lea.vmem %s435, 36
        %v740 = vld [vmem:[%s739] sm:$0xf]
        %741 = vmatprep.subr.bf16.mxu0 0
        %742 = vmatpush1.bf16.xpose.msra.mxu0 0
        %743 = vmatprep.subr.bf16.mxu0 0
        %744 = vmatpush1.bf16.xpose.msra.mxu0 0
        %745 = vmatprep.subr.bf16.mxu0 0
        %746 = vmatpush1.bf16.xpose.msra.mxu0 0
        %747 = vmatprep.subr.bf16.mxu0 0
        %748 = vmatpush1.bf16.xpose.msra.mxu0 0
        %749 = vmatprep.subr.bf16.mxu0 0
        %750 = vmatpush1.bf16.xpose.msra.mxu0 0
        %751 = vmatprep.subr.bf16.mxu0 0
        %752 = vmatpush1.bf16.xpose.msra.mxu0 0
        %753 = vmatprep.subr.bf16.mxu0 0
        %754 = vmatpush1.bf16.xpose.msra.mxu0 0
        %755 = vmatprep.subr.bf16.mxu0 0
        %756 = vmatpush1.bf16.xpose.msra.mxu0 %v736
        %757 = vmatprep.subr.bf16.mxu0 0
        %758 = vmatpush2.bf16.xpose.msra.mxu0 0
        %759 = vmatprep.subr.bf16.mxu0 0
        %760 = vmatpush2.bf16.xpose.msra.mxu0 0
        %761 = vmatprep.subr.bf16.mxu0 0
        %762 = vmatpush2.bf16.xpose.msra.mxu0 0
        %763 = vmatprep.subr.bf16.mxu0 0
        %764 = vmatpush2.bf16.xpose.msra.mxu0 0
        %765 = vmatprep.subr.bf16.mxu0 0
        %766 = vmatpush2.bf16.xpose.msra.mxu0 0
        %767 = vmatprep.subr.bf16.mxu0 0
        %768 = vmatpush2.bf16.xpose.msra.mxu0 0
        %769 = vmatprep.subr.bf16.mxu0 0
        %770 = vmatpush2.bf16.xpose.msra.mxu0 0
        %771 = vmatprep.subr.bf16.mxu0 0
        %772 = vmatpush2.bf16.xpose.msra.mxu0 0
        %773 = vmatprep.mubr.bf16.mxu0 0
        %774 = vmatmul.mubr.bf16.gmra.mxu0 %v469
        %v775 = vpop.f32.mrf.mxu0
        %v776 = vadd.f32 0.0, %v775
        %v777 = vpop.f32.mrf.mxu0
        %v778 = vpop.f32.mrf.mxu0
        %v779 = vadd.f32 0.0, %v778
        %v780 = vpop.f32.mrf.mxu0
        %781 = vdwg.mxu0
        %782 = vmatprep.subr.bf16.mxu0 0
        %783 = vmatpush1.bf16.xpose.msra.mxu0 0
        %784 = vmatprep.subr.bf16.mxu0 0
        %785 = vmatpush1.bf16.xpose.msra.mxu0 0
        %786 = vmatprep.subr.bf16.mxu0 0
        %787 = vmatpush1.bf16.xpose.msra.mxu0 0
        %788 = vmatprep.subr.bf16.mxu0 0
        %789 = vmatpush1.bf16.xpose.msra.mxu0 0
        %790 = vmatprep.subr.bf16.mxu0 0
        %791 = vmatpush1.bf16.xpose.msra.mxu0 0
        %792 = vmatprep.subr.bf16.mxu0 0
        %793 = vmatpush1.bf16.xpose.msra.mxu0 0
        %794 = vmatprep.subr.bf16.mxu0 0
        %795 = vmatpush1.bf16.xpose.msra.mxu0 0
        %796 = vmatprep.subr.bf16.mxu0 0
        %797 = vmatpush1.bf16.xpose.msra.mxu0 %v738
        %798 = vmatprep.subr.bf16.mxu0 0
        %799 = vmatpush2.bf16.xpose.msra.mxu0 0
        %800 = vmatprep.subr.bf16.mxu0 0
        %801 = vmatpush2.bf16.xpose.msra.mxu0 0
        %802 = vmatprep.subr.bf16.mxu0 0
        %803 = vmatpush2.bf16.xpose.msra.mxu0 0
        %804 = vmatprep.subr.bf16.mxu0 0
        %805 = vmatpush2.bf16.xpose.msra.mxu0 0
        %806 = vmatprep.subr.bf16.mxu0 0
        %807 = vmatpush2.bf16.xpose.msra.mxu0 0
        %808 = vmatprep.subr.bf16.mxu0 0
        %809 = vmatpush2.bf16.xpose.msra.mxu0 0
        %810 = vmatprep.subr.bf16.mxu0 0
        %811 = vmatpush2.bf16.xpose.msra.mxu0 0
        %812 = vmatprep.subr.bf16.mxu0 0
        %813 = vmatpush2.bf16.xpose.msra.mxu0 0
        %814 = vmatprep.mubr.bf16.mxu0 0
        %815 = vmatmul.mubr.bf16.gmra.mxu0 %v469
        %v816 = vpop.f32.mrf.mxu0
        %v817 = vadd.f32 0.0, %v816
        %v818 = vpop.f32.mrf.mxu0
        %v819 = vpop.f32.mrf.mxu0
        %v820 = vadd.f32 0.0, %v819
        %v821 = vpop.f32.mrf.mxu0
        %822 = vdwg.mxu0
        %823 = vmatprep.subr.bf16.mxu0 0
        %824 = vmatpush1.bf16.xpose.msra.mxu0 0
        %825 = vmatprep.subr.bf16.mxu0 0
        %826 = vmatpush1.bf16.xpose.msra.mxu0 0
        %827 = vmatprep.subr.bf16.mxu0 0
        %828 = vmatpush1.bf16.xpose.msra.mxu0 0
        %829 = vmatprep.subr.bf16.mxu0 0
        %830 = vmatpush1.bf16.xpose.msra.mxu0 0
        %831 = vmatprep.subr.bf16.mxu0 0
        %832 = vmatpush1.bf16.xpose.msra.mxu0 0
        %833 = vmatprep.subr.bf16.mxu0 0
        %834 = vmatpush1.bf16.xpose.msra.mxu0 0
        %835 = vmatprep.subr.bf16.mxu0 0
        %836 = vmatpush1.bf16.xpose.msra.mxu0 0
        %837 = vmatprep.subr.bf16.mxu0 0
        %838 = vmatpush1.bf16.xpose.msra.mxu0 %v740
        %839 = vmatprep.subr.bf16.mxu0 0
        %840 = vmatpush2.bf16.xpose.msra.mxu0 0
        %841 = vmatprep.subr.bf16.mxu0 0
        %842 = vmatpush2.bf16.xpose.msra.mxu0 0
        %843 = vmatprep.subr.bf16.mxu0 0
        %844 = vmatpush2.bf16.xpose.msra.mxu0 0
        %845 = vmatprep.subr.bf16.mxu0 0
        %846 = vmatpush2.bf16.xpose.msra.mxu0 0
        %847 = vmatprep.subr.bf16.mxu0 0
        %848 = vmatpush2.bf16.xpose.msra.mxu0 0
        %849 = vmatprep.subr.bf16.mxu0 0
        %850 = vmatpush2.bf16.xpose.msra.mxu0 0
        %851 = vmatprep.subr.bf16.mxu0 0
        %852 = vmatpush2.bf16.xpose.msra.mxu0 0
        %853 = vmatprep.subr.bf16.mxu0 0
        %854 = vmatpush2.bf16.xpose.msra.mxu0 0
        %855 = vmatprep.mubr.bf16.mxu0 0
        %856 = vmatmul.mubr.bf16.gmra.mxu0 %v469
        %v857 = vpop.f32.mrf.mxu0
        %v858 = vadd.f32 0.0, %v857
        %v859 = vpop.f32.mrf.mxu0
        %v860 = vpop.f32.mrf.mxu0
        %v861 = vadd.f32 0.0, %v860
        %v862 = vpop.f32.mrf.mxu0
        %863 = vdwg.mxu0
        %v864 = vpack.c.bf16 %v779, %v776
        %v865 = vpack.c.bf16 %v820, %v817
        %v867 = vsel %vm612, %v864, 0
        %v870 = vsel %vm612, %v865, 0
        %872 = vmatprep.subr.bf16.mxu0 0
        %873 = vmatpush1.bf16.xpose.msra.mxu0 0
        %874 = vmatprep.subr.bf16.mxu0 0
        %875 = vmatpush1.bf16.xpose.msra.mxu0 0
        %876 = vmatprep.subr.bf16.mxu0 0
        %877 = vmatpush1.bf16.xpose.msra.mxu0 0
        %878 = vmatprep.subr.bf16.mxu0 0
        %879 = vmatpush1.bf16.xpose.msra.mxu0 0
        %880 = vmatprep.subr.bf16.mxu0 0
        %881 = vmatpush1.bf16.xpose.msra.mxu0 0
        %882 = vmatprep.subr.bf16.mxu0 0
        %883 = vmatpush1.bf16.xpose.msra.mxu0 0
        %884 = vmatprep.subr.bf16.mxu0 0
        %885 = vmatpush1.bf16.xpose.msra.mxu0 0
        %886 = vmatprep.subr.bf16.mxu0 0
        %887 = vmatpush1.bf16.xpose.msra.mxu0 %v870
        %888 = vmatprep.subr.bf16.mxu0 0
        %889 = vmatpush2.bf16.xpose.msra.mxu0 0
        %890 = vmatprep.subr.bf16.mxu0 0
        %891 = vmatpush2.bf16.xpose.msra.mxu0 0
        %892 = vmatprep.subr.bf16.mxu0 0
        %893 = vmatpush2.bf16.xpose.msra.mxu0 0
        %894 = vmatprep.subr.bf16.mxu0 0
        %895 = vmatpush2.bf16.xpose.msra.mxu0 0
        %896 = vmatprep.subr.bf16.mxu0 0
        %897 = vmatpush2.bf16.xpose.msra.mxu0 0
        %898 = vmatprep.subr.bf16.mxu0 0
        %899 = vmatpush2.bf16.xpose.msra.mxu0 0
        %900 = vmatprep.subr.bf16.mxu0 0
        %901 = vmatpush2.bf16.xpose.msra.mxu0 0
        %902 = vmatprep.subr.bf16.mxu0 0
        %903 = vmatpush2.bf16.xpose.msra.mxu0 0
        %904 = vmatprep.mubr.bf16.mxu0 0
        %905 = vmatmul.mubr.bf16.gmra.mxu0 %v867
        %v906 = vpop.f32.mrf.mxu0
        %v907 = vadd.f32 0.0, %v906
        %v908 = vpop.f32.mrf.mxu0
        %v909 = vpop.f32.mrf.mxu0
        %v910 = vadd.f32 0.0, %v909
        %v911 = vpop.f32.mrf.mxu0
        %912 = vdwg.mxu0
        %v913 = vmul.f32 %v907, 0.35355338
        %v914 = vmul.f32 %v910, 0.35355338
        %v915 = vsel %vm480, -1e+30, %v913
        %v916 = vsel %vm481, -1e+30, %v914
        %v917 = vsel %vm664, %v915, -inf
        %918 = vmax.xlane.f32.xlu0 %v917
        %v919 = vpop.xlane.xlu0 %918
        %v920 = vsel %vm664, %v916, -inf
        %921 = vmax.xlane.f32.xlu0 %v920
        %v922 = vpop.xlane.xlu0 %921
        %v923 = vsub.f32 %v915, %v919
        %v924 = vsub.f32 %v916, %v922
        %v925 = vmul.f32 %v923, 1.442695
        %v926 = vpow.pop %v925
        %v927 = vmul.f32 %v924, 1.442695
        %v928 = vpow.pop %v927
        %v929 = vsel %vm664, %v926, 0.0
        %930 = vadd.xlane.f32.xlu0 %v929
        %v931 = vpop.xlane.xlu0 %930
        %v932 = vsel %vm664, %v928, 0.0
        %933 = vadd.xlane.f32.xlu0 %v932
        %v934 = vpop.xlane.xlu0 %933
        %v935 = vrcp.pop %v931
        %v936 = vrcp.pop %v934
        %v937 = vmul.f32 %v926, %v935
        %v938 = vmul.f32 %v928, %v936
        %v939 = vpack.c.bf16 %v938, %v937
        %v940 = vpack.c.bf16 %v861, %v858
        %v942 = vsel %vm664, %v939, 0
        %944 = vmatprep.subr.bf16.mxu0 0
        %945 = vmatpush1.bf16.msra.mxu0 0
        %946 = vmatprep.subr.bf16.mxu0 0
        %947 = vmatpush1.bf16.msra.mxu0 0
        %948 = vmatprep.subr.bf16.mxu0 0
        %949 = vmatpush1.bf16.msra.mxu0 0
        %950 = vmatprep.subr.bf16.mxu0 0
        %951 = vmatpush1.bf16.msra.mxu0 0
        %952 = vmatprep.subr.bf16.mxu0 0
        %953 = vmatpush1.bf16.msra.mxu0 0
        %954 = vmatprep.subr.bf16.mxu0 0
        %955 = vmatpush1.bf16.msra.mxu0 0
        %956 = vmatprep.subr.bf16.mxu0 0
        %957 = vmatpush1.bf16.msra.mxu0 0
        %958 = vmatprep.subr.bf16.mxu0 0
        %959 = vmatpush1.bf16.msra.mxu0 %v940
        %960 = vmatprep.subr.bf16.mxu0 0
        %961 = vmatpush2.bf16.msra.mxu0 0
        %962 = vmatprep.subr.bf16.mxu0 0
        %963 = vmatpush2.bf16.msra.mxu0 0
        %964 = vmatprep.subr.bf16.mxu0 0
        %965 = vmatpush2.bf16.msra.mxu0 0
        %966 = vmatprep.subr.bf16.mxu0 0
        %967 = vmatpush2.bf16.msra.mxu0 0
        %968 = vmatprep.subr.bf16.mxu0 0
        %969 = vmatpush2.bf16.msra.mxu0 0
        %970 = vmatprep.subr.bf16.mxu0 0
        %971 = vmatpush2.bf16.msra.mxu0 0
        %972 = vmatprep.subr.bf16.mxu0 0
        %973 = vmatpush2.bf16.msra.mxu0 0
        %974 = vmatprep.subr.bf16.mxu0 0
        %975 = vmatpush2.bf16.msra.mxu0 0
        %976 = vmatprep.mubr.bf16.mxu0 0
        %977 = vmatmul.mubr.bf16.gmra.mxu0 %v942
        %v978 = vpop.f32.mrf.mxu0
        %v979 = vadd.f32 0.0, %v978
        %v980 = vpop.f32.mrf.mxu0
        %v981 = vpop.f32.mrf.mxu0
        %v982 = vadd.f32 0.0, %v981
        %v983 = vpop.f32.mrf.mxu0
        %984 = vdwg.mxu0
        %v985 = vpack.c.bf16 %v982, %v979
        %s986 = scalar_lea.vmem %s440, 4
        %v987 = vld [vmem:[%s986] sm:$0xf]
        %v989 = vsel %vm612, %v985, 0
        %vm991 = vcmask 1043456
        %v993 = vsel %vm991, %v987, 0
        %995 = vmatprep.subr.bf16.mxu0 0
        %996 = vmatpush1.bf16.msra.mxu0 0
        %997 = vmatprep.subr.bf16.mxu0 0
        %998 = vmatpush1.bf16.msra.mxu0 0
        %999 = vmatprep.subr.bf16.mxu0 0
        %1000 = vmatpush1.bf16.msra.mxu0 0
        %1001 = vmatprep.subr.bf16.mxu0 0
        %1002 = vmatpush1.bf16.msra.mxu0 0
        %1003 = vmatprep.subr.bf16.mxu0 0
        %1004 = vmatpush1.bf16.msra.mxu0 0
        %1005 = vmatprep.subr.bf16.mxu0 0
        %1006 = vmatpush1.bf16.msra.mxu0 0
        %1007 = vmatprep.subr.bf16.mxu0 0
        %1008 = vmatpush1.bf16.msra.mxu0 0
        %1009 = vmatprep.subr.bf16.mxu0 0
        %1010 = vmatpush1.bf16.msra.mxu0 %v993
        %1011 = vmatprep.subr.bf16.mxu0 0
        %1012 = vmatpush2.bf16.msra.mxu0 0
        %1013 = vmatprep.subr.bf16.mxu0 0
        %1014 = vmatpush2.bf16.msra.mxu0 0
        %1015 = vmatprep.subr.bf16.mxu0 0
        %1016 = vmatpush2.bf16.msra.mxu0 0
        %1017 = vmatprep.subr.bf16.mxu0 0
        %1018 = vmatpush2.bf16.msra.mxu0 0
        %1019 = vmatprep.subr.bf16.mxu0 0
        %1020 = vmatpush2.bf16.msra.mxu0 0
        %1021 = vmatprep.subr.bf16.mxu0 0
        %1022 = vmatpush2.bf16.msra.mxu0 0
        %1023 = vmatprep.subr.bf16.mxu0 0
        %1024 = vmatpush2.bf16.msra.mxu0 0
        %1025 = vmatprep.subr.bf16.mxu0 0
        %1026 = vmatpush2.bf16.msra.mxu0 0
        %1027 = vmatprep.mubr.bf16.mxu0 0
        %1028 = vmatmul.mubr.bf16.gmra.mxu0 %v989
        %v1029 = vpop.f32.mrf.mxu0
        %v1030 = vadd.f32 0.0, %v1029
        %v1031 = vpop.f32.mrf.mxu0
        %v1032 = vpop.f32.mrf.mxu0
        %v1033 = vadd.f32 0.0, %v1032
        %v1034 = vpop.f32.mrf.mxu0
        %1035 = vdwg.mxu0
        %v1037 = vsel %vm612, %v733, 0
        %v1040 = vsel %vm991, %v734, 0
        %1042 = vmatprep.subr.bf16.mxu0 0
        %1043 = vmatpush1.bf16.msra.mxu0 0
        %1044 = vmatprep.subr.bf16.mxu0 0
        %1045 = vmatpush1.bf16.msra.mxu0 0
        %1046 = vmatprep.subr.bf16.mxu0 0
        %1047 = vmatpush1.bf16.msra.mxu0 0
        %1048 = vmatprep.subr.bf16.mxu0 0
        %1049 = vmatpush1.bf16.msra.mxu0 0
        %1050 = vmatprep.subr.bf16.mxu0 0
        %1051 = vmatpush1.bf16.msra.mxu0 0
        %1052 = vmatprep.subr.bf16.mxu0 0
        %1053 = vmatpush1.bf16.msra.mxu0 0
        %1054 = vmatprep.subr.bf16.mxu0 0
        %1055 = vmatpush1.bf16.msra.mxu0 0
        %1056 = vmatprep.subr.bf16.mxu0 0
        %1057 = vmatpush1.bf16.msra.mxu0 %v1040
        %1058 = vmatprep.subr.bf16.mxu0 0
        %1059 = vmatpush2.bf16.msra.mxu0 0
        %1060 = vmatprep.subr.bf16.mxu0 0
        %1061 = vmatpush2.bf16.msra.mxu0 0
        %1062 = vmatprep.subr.bf16.mxu0 0
        %1063 = vmatpush2.bf16.msra.mxu0 0
        %1064 = vmatprep.subr.bf16.mxu0 0
        %1065 = vmatpush2.bf16.msra.mxu0 0
        %1066 = vmatprep.subr.bf16.mxu0 0
        %1067 = vmatpush2.bf16.msra.mxu0 0
        %1068 = vmatprep.subr.bf16.mxu0 0
        %1069 = vmatpush2.bf16.msra.mxu0 0
        %1070 = vmatprep.subr.bf16.mxu0 0
        %1071 = vmatpush2.bf16.msra.mxu0 0
        %1072 = vmatprep.subr.bf16.mxu0 0
        %1073 = vmatpush2.bf16.msra.mxu0 0
        %1074 = vmatprep.mubr.bf16.mxu0 0
        %1075 = vmatmul.mubr.bf16.gmra.mxu0 %v1037
        %v1076 = vpop.f32.mrf.mxu0
        %v1077 = vadd.f32 %v1030, %v1076
        %v1078 = vpop.f32.mrf.mxu0
        %v1079 = vpop.f32.mrf.mxu0
        %v1080 = vadd.f32 %v1033, %v1079
        %v1081 = vpop.f32.mrf.mxu0
        %1082 = vdwg.mxu0
        %s1083 = scalar_lea.vmem %s435, 8
        %v1084 = vld [vmem:[%s1083] sm:$0xf]
        %s1085 = scalar_lea.vmem %s435, 24
        %v1086 = vld [vmem:[%s1085] sm:$0xf]
        %s1087 = scalar_lea.vmem %s435, 40
        %v1088 = vld [vmem:[%s1087] sm:$0xf]
        %1089 = vmatprep.subr.bf16.mxu0 0
        %1090 = vmatpush1.bf16.xpose.msra.mxu0 0
        %1091 = vmatprep.subr.bf16.mxu0 0
        %1092 = vmatpush1.bf16.xpose.msra.mxu0 0
        %1093 = vmatprep.subr.bf16.mxu0 0
        %1094 = vmatpush1.bf16.xpose.msra.mxu0 0
        %1095 = vmatprep.subr.bf16.mxu0 0
        %1096 = vmatpush1.bf16.xpose.msra.mxu0 0
        %1097 = vmatprep.subr.bf16.mxu0 0
        %1098 = vmatpush1.bf16.xpose.msra.mxu0 0
        %1099 = vmatprep.subr.bf16.mxu0 0
        %1100 = vmatpush1.bf16.xpose.msra.mxu0 0
        %1101 = vmatprep.subr.bf16.mxu0 0
        %1102 = vmatpush1.bf16.xpose.msra.mxu0 0
        %1103 = vmatprep.subr.bf16.mxu0 0
        %1104 = vmatpush1.bf16.xpose.msra.mxu0 %v1084
        %1105 = vmatprep.subr.bf16.mxu0 0
        %1106 = vmatpush2.bf16.xpose.msra.mxu0 0
        %1107 = vmatprep.subr.bf16.mxu0 0
        %1108 = vmatpush2.bf16.xpose.msra.mxu0 0
        %1109 = vmatprep.subr.bf16.mxu0 0
        %1110 = vmatpush2.bf16.xpose.msra.mxu0 0
        %1111 = vmatprep.subr.bf16.mxu0 0
        %1112 = vmatpush2.bf16.xpose.msra.mxu0 0
        %1113 = vmatprep.subr.bf16.mxu0 0
        %1114 = vmatpush2.bf16.xpose.msra.mxu0 0
        %1115 = vmatprep.subr.bf16.mxu0 0
        %1116 = vmatpush2.bf16.xpose.msra.mxu0 0
        %1117 = vmatprep.subr.bf16.mxu0 0
        %1118 = vmatpush2.bf16.xpose.msra.mxu0 0
        %1119 = vmatprep.subr.bf16.mxu0 0
        %1120 = vmatpush2.bf16.xpose.msra.mxu0 0
        %1121 = vmatprep.mubr.bf16.mxu0 0
        %1122 = vmatmul.mubr.bf16.gmra.mxu0 %v469
        %v1123 = vpop.f32.mrf.mxu0
        %v1124 = vadd.f32 0.0, %v1123
        %v1125 = vpop.f32.mrf.mxu0
        %v1126 = vpop.f32.mrf.mxu0
        %v1127 = vadd.f32 0.0, %v1126
        %v1128 = vpop.f32.mrf.mxu0
        %1129 = vdwg.mxu0
        %1130 = vmatprep.subr.bf16.mxu0 0
        %1131 = vmatpush1.bf16.xpose.msra.mxu0 0
        %1132 = vmatprep.subr.bf16.mxu0 0
        %1133 = vmatpush1.bf16.xpose.msra.mxu0 0
        %1134 = vmatprep.subr.bf16.mxu0 0
        %1135 = vmatpush1.bf16.xpose.msra.mxu0 0
        %1136 = vmatprep.subr.bf16.mxu0 0
        %1137 = vmatpush1.bf16.xpose.msra.mxu0 0
        %1138 = vmatprep.subr.bf16.mxu0 0
        %1139 = vmatpush1.bf16.xpose.msra.mxu0 0
        %1140 = vmatprep.subr.bf16.mxu0 0
        %1141 = vmatpush1.bf16.xpose.msra.mxu0 0
        %1142 = vmatprep.subr.bf16.mxu0 0
        %1143 = vmatpush1.bf16.xpose.msra.mxu0 0
        %1144 = vmatprep.subr.bf16.mxu0 0
        %1145 = vmatpush1.bf16.xpose.msra.mxu0 %v1086
        %1146 = vmatprep.subr.bf16.mxu0 0
        %1147 = vmatpush2.bf16.xpose.msra.mxu0 0
        %1148 = vmatprep.subr.bf16.mxu0 0
        %1149 = vmatpush2.bf16.xpose.msra.mxu0 0
        %1150 = vmatprep.subr.bf16.mxu0 0
        %1151 = vmatpush2.bf16.xpose.msra.mxu0 0
        %1152 = vmatprep.subr.bf16.mxu0 0
        %1153 = vmatpush2.bf16.xpose.msra.mxu0 0
        %1154 = vmatprep.subr.bf16.mxu0 0
        %1155 = vmatpush2.bf16.xpose.msra.mxu0 0
        %1156 = vmatprep.subr.bf16.mxu0 0
        %1157 = vmatpush2.bf16.xpose.msra.mxu0 0
        %1158 = vmatprep.subr.bf16.mxu0 0
        %1159 = vmatpush2.bf16.xpose.msra.mxu0 0
        %1160 = vmatprep.subr.bf16.mxu0 0
        %1161 = vmatpush2.bf16.xpose.msra.mxu0 0
        %1162 = vmatprep.mubr.bf16.mxu0 0
        %1163 = vmatmul.mubr.bf16.gmra.mxu0 %v469
        %v1164 = vpop.f32.mrf.mxu0
        %v1165 = vadd.f32 0.0, %v1164
        %v1166 = vpop.f32.mrf.mxu0
        %v1167 = vpop.f32.mrf.mxu0
        %v1168 = vadd.f32 0.0, %v1167
        %v1169 = vpop.f32.mrf.mxu0
        %1170 = vdwg.mxu0
        %1171 = vmatprep.subr.bf16.mxu0 0
        %1172 = vmatpush1.bf16.xpose.msra.mxu0 0
        %1173 = vmatprep.subr.bf16.mxu0 0
        %1174 = vmatpush1.bf16.xpose.msra.mxu0 0
        %1175 = vmatprep.subr.bf16.mxu0 0
        %1176 = vmatpush1.bf16.xpose.msra.mxu0 0
        %1177 = vmatprep.subr.bf16.mxu0 0
        %1178 = vmatpush1.bf16.xpose.msra.mxu0 0
        %1179 = vmatprep.subr.bf16.mxu0 0
        %1180 = vmatpush1.bf16.xpose.msra.mxu0 0
        %1181 = vmatprep.subr.bf16.mxu0 0
        %1182 = vmatpush1.bf16.xpose.msra.mxu0 0
        %1183 = vmatprep.subr.bf16.mxu0 0
        %1184 = vmatpush1.bf16.xpose.msra.mxu0 0
        %1185 = vmatprep.subr.bf16.mxu0 0
        %1186 = vmatpush1.bf16.xpose.msra.mxu0 %v1088
        %1187 = vmatprep.subr.bf16.mxu0 0
        %1188 = vmatpush2.bf16.xpose.msra.mxu0 0
        %1189 = vmatprep.subr.bf16.mxu0 0
        %1190 = vmatpush2.bf16.xpose.msra.mxu0 0
        %1191 = vmatprep.subr.bf16.mxu0 0
        %1192 = vmatpush2.bf16.xpose.msra.mxu0 0
        %1193 = vmatprep.subr.bf16.mxu0 0
        %1194 = vmatpush2.bf16.xpose.msra.mxu0 0
        %1195 = vmatprep.subr.bf16.mxu0 0
        %1196 = vmatpush2.bf16.xpose.msra.mxu0 0
        %1197 = vmatprep.subr.bf16.mxu0 0
        %1198 = vmatpush2.bf16.xpose.msra.mxu0 0
        %1199 = vmatprep.subr.bf16.mxu0 0
        %1200 = vmatpush2.bf16.xpose.msra.mxu0 0
        %1201 = vmatprep.subr.bf16.mxu0 0
        %1202 = vmatpush2.bf16.xpose.msra.mxu0 0
        %1203 = vmatprep.mubr.bf16.mxu0 0
        %1204 = vmatmul.mubr.bf16.gmra.mxu0 %v469
        %v1205 = vpop.f32.mrf.mxu0
        %v1206 = vadd.f32 0.0, %v1205
        %v1207 = vpop.f32.mrf.mxu0
        %v1208 = vpop.f32.mrf.mxu0
        %v1209 = vadd.f32 0.0, %v1208
        %v1210 = vpop.f32.mrf.mxu0
        %1211 = vdwg.mxu0
        %v1212 = vpack.c.bf16 %v1127, %v1124
        %v1213 = vpack.c.bf16 %v1168, %v1165
        %v1215 = vsel %vm612, %v1212, 0
        %v1218 = vsel %vm612, %v1213, 0
        %1220 = vmatprep.subr.bf16.mxu0 0
        %1221 = vmatpush1.bf16.xpose.msra.mxu0 0
        %1222 = vmatprep.subr.bf16.mxu0 0
        %1223 = vmatpush1.bf16.xpose.msra.mxu0 0
        %1224 = vmatprep.subr.bf16.mxu0 0
        %1225 = vmatpush1.bf16.xpose.msra.mxu0 0
        %1226 = vmatprep.subr.bf16.mxu0 0
        %1227 = vmatpush1.bf16.xpose.msra.mxu0 0
        %1228 = vmatprep.subr.bf16.mxu0 0
        %1229 = vmatpush1.bf16.xpose.msra.mxu0 0
        %1230 = vmatprep.subr.bf16.mxu0 0
        %1231 = vmatpush1.bf16.xpose.msra.mxu0 0
        %1232 = vmatprep.subr.bf16.mxu0 0
        %1233 = vmatpush1.bf16.xpose.msra.mxu0 0
        %1234 = vmatprep.subr.bf16.mxu0 0
        %1235 = vmatpush1.bf16.xpose.msra.mxu0 %v1218
        %1236 = vmatprep.subr.bf16.mxu0 0
        %1237 = vmatpush2.bf16.xpose.msra.mxu0 0
        %1238 = vmatprep.subr.bf16.mxu0 0
        %1239 = vmatpush2.bf16.xpose.msra.mxu0 0
        %1240 = vmatprep.subr.bf16.mxu0 0
        %1241 = vmatpush2.bf16.xpose.msra.mxu0 0
        %1242 = vmatprep.subr.bf16.mxu0 0
        %1243 = vmatpush2.bf16.xpose.msra.mxu0 0
        %1244 = vmatprep.subr.bf16.mxu0 0
        %1245 = vmatpush2.bf16.xpose.msra.mxu0 0
        %1246 = vmatprep.subr.bf16.mxu0 0
        %1247 = vmatpush2.bf16.xpose.msra.mxu0 0
        %1248 = vmatprep.subr.bf16.mxu0 0
        %1249 = vmatpush2.bf16.xpose.msra.mxu0 0
        %1250 = vmatprep.subr.bf16.mxu0 0
        %1251 = vmatpush2.bf16.xpose.msra.mxu0 0
        %1252 = vmatprep.mubr.bf16.mxu0 0
        %1253 = vmatmul.mubr.bf16.gmra.mxu0 %v1215
        %v1254 = vpop.f32.mrf.mxu0
        %v1255 = vadd.f32 0.0, %v1254
        %v1256 = vpop.f32.mrf.mxu0
        %v1257 = vpop.f32.mrf.mxu0
        %v1258 = vadd.f32 0.0, %v1257
        %v1259 = vpop.f32.mrf.mxu0
        %1260 = vdwg.mxu0
        %v1261 = vmul.f32 %v1255, 0.35355338
        %v1262 = vmul.f32 %v1258, 0.35355338
        %v1263 = vsel %vm480, -1e+30, %v1261
        %v1264 = vsel %vm481, -1e+30, %v1262
        %v1265 = vsel %vm664, %v1263, -inf
        %1266 = vmax.xlane.f32.xlu0 %v1265
        %v1267 = vpop.xlane.xlu0 %1266
        %v1268 = vsel %vm664, %v1264, -inf
        %1269 = vmax.xlane.f32.xlu0 %v1268
        %v1270 = vpop.xlane.xlu0 %1269
        %v1271 = vsub.f32 %v1263, %v1267
        %v1272 = vsub.f32 %v1264, %v1270
        %v1273 = vmul.f32 %v1271, 1.442695
        %v1274 = vpow.pop %v1273
        %v1275 = vmul.f32 %v1272, 1.442695
        %v1276 = vpow.pop %v1275
        %v1277 = vsel %vm664, %v1274, 0.0
        %1278 = vadd.xlane.f32.xlu0 %v1277
        %v1279 = vpop.xlane.xlu0 %1278
        %v1280 = vsel %vm664, %v1276, 0.0
        %1281 = vadd.xlane.f32.xlu0 %v1280
        %v1282 = vpop.xlane.xlu0 %1281
        %v1283 = vrcp.pop %v1279
        %v1284 = vrcp.pop %v1282
        %v1285 = vmul.f32 %v1274, %v1283
        %v1286 = vmul.f32 %v1276, %v1284
        %v1287 = vpack.c.bf16 %v1286, %v1285
        %v1288 = vpack.c.bf16 %v1209, %v1206
        %v1290 = vsel %vm664, %v1287, 0
        %1292 = vmatprep.subr.bf16.mxu0 0
        %1293 = vmatpush1.bf16.msra.mxu0 0
        %1294 = vmatprep.subr.bf16.mxu0 0
        %1295 = vmatpush1.bf16.msra.mxu0 0
        %1296 = vmatprep.subr.bf16.mxu0 0
        %1297 = vmatpush1.bf16.msra.mxu0 0
        %1298 = vmatprep.subr.bf16.mxu0 0
        %1299 = vmatpush1.bf16.msra.mxu0 0
        %1300 = vmatprep.subr.bf16.mxu0 0
        %1301 = vmatpush1.bf16.msra.mxu0 0
        %1302 = vmatprep.subr.bf16.mxu0 0
        %1303 = vmatpush1.bf16.msra.mxu0 0
        %1304 = vmatprep.subr.bf16.mxu0 0
        %1305 = vmatpush1.bf16.msra.mxu0 0
        %1306 = vmatprep.subr.bf16.mxu0 0
        %1307 = vmatpush1.bf16.msra.mxu0 %v1288
        %1308 = vmatprep.subr.bf16.mxu0 0
        %1309 = vmatpush2.bf16.msra.mxu0 0
        %1310 = vmatprep.subr.bf16.mxu0 0
        %1311 = vmatpush2.bf16.msra.mxu0 0
        %1312 = vmatprep.subr.bf16.mxu0 0
        %1313 = vmatpush2.bf16.msra.mxu0 0
        %1314 = vmatprep.subr.bf16.mxu0 0
        %1315 = vmatpush2.bf16.msra.mxu0 0
        %1316 = vmatprep.subr.bf16.mxu0 0
        %1317 = vmatpush2.bf16.msra.mxu0 0
        %1318 = vmatprep.subr.bf16.mxu0 0
        %1319 = vmatpush2.bf16.msra.mxu0 0
        %1320 = vmatprep.subr.bf16.mxu0 0
        %1321 = vmatpush2.bf16.msra.mxu0 0
        %1322 = vmatprep.subr.bf16.mxu0 0
        %1323 = vmatpush2.bf16.msra.mxu0 0
        %1324 = vmatprep.mubr.bf16.mxu0 0
        %1325 = vmatmul.mubr.bf16.gmra.mxu0 %v1290
        %v1326 = vpop.f32.mrf.mxu0
        %v1327 = vadd.f32 0.0, %v1326
        %v1328 = vpop.f32.mrf.mxu0
        %v1329 = vpop.f32.mrf.mxu0
        %v1330 = vadd.f32 0.0, %v1329
        %v1331 = vpop.f32.mrf.mxu0
        %1332 = vdwg.mxu0
        %v1333 = vpack.c.bf16 %v1330, %v1327
        %s1334 = scalar_lea.vmem %s440, 8
        %v1335 = vld [vmem:[%s1334] sm:$0xf]
        %v1337 = vsel %vm612, %v1333, 0
        %v1340 = vsel %vm991, %v1335, 0
        %1342 = vmatprep.subr.bf16.mxu0 0
        %1343 = vmatpush1.bf16.msra.mxu0 0
        %1344 = vmatprep.subr.bf16.mxu0 0
        %1345 = vmatpush1.bf16.msra.mxu0 0
        %1346 = vmatprep.subr.bf16.mxu0 0
        %1347 = vmatpush1.bf16.msra.mxu0 0
        %1348 = vmatprep.subr.bf16.mxu0 0
        %1349 = vmatpush1.bf16.msra.mxu0 0
        %1350 = vmatprep.subr.bf16.mxu0 0
        %1351 = vmatpush1.bf16.msra.mxu0 0
        %1352 = vmatprep.subr.bf16.mxu0 0
        %1353 = vmatpush1.bf16.msra.mxu0 0
        %1354 = vmatprep.subr.bf16.mxu0 0
        %1355 = vmatpush1.bf16.msra.mxu0 0
        %1356 = vmatprep.subr.bf16.mxu0 0
        %1357 = vmatpush1.bf16.msra.mxu0 %v1340
        %1358 = vmatprep.subr.bf16.mxu0 0
        %1359 = vmatpush2.bf16.msra.mxu0 0
        %1360 = vmatprep.subr.bf16.mxu0 0
        %1361 = vmatpush2.bf16.msra.mxu0 0
        %1362 = vmatprep.subr.bf16.mxu0 0
        %1363 = vmatpush2.bf16.msra.mxu0 0
        %1364 = vmatprep.subr.bf16.mxu0 0
        %1365 = vmatpush2.bf16.msra.mxu0 0
        %1366 = vmatprep.subr.bf16.mxu0 0
        %1367 = vmatpush2.bf16.msra.mxu0 0
        %1368 = vmatprep.subr.bf16.mxu0 0
        %1369 = vmatpush2.bf16.msra.mxu0 0
        %1370 = vmatprep.subr.bf16.mxu0 0
        %1371 = vmatpush2.bf16.msra.mxu0 0
        %1372 = vmatprep.subr.bf16.mxu0 0
        %1373 = vmatpush2.bf16.msra.mxu0 0
        %1374 = vmatprep.mubr.bf16.mxu0 0
        %1375 = vmatmul.mubr.bf16.gmra.mxu0 %v1337
        %v1376 = vpop.f32.mrf.mxu0
        %v1377 = vadd.f32 0.0, %v1376
        %v1378 = vpop.f32.mrf.mxu0
        %v1379 = vpop.f32.mrf.mxu0
        %v1380 = vadd.f32 0.0, %v1379
        %v1381 = vpop.f32.mrf.mxu0
        %1382 = vdwg.mxu0
        %v1383 = vadd.f32 %v1077, %v1377
        %v1384 = vadd.f32 %v1080, %v1380
        %s1385 = scalar_lea.vmem %s435, 12
        %v1386 = vld [vmem:[%s1385] sm:$0xf]
        %s1387 = scalar_lea.vmem %s435, 28
        %v1388 = vld [vmem:[%s1387] sm:$0xf]
        %s1389 = scalar_lea.vmem %s435, 44
        %v1390 = vld [vmem:[%s1389] sm:$0xf]
        %1391 = vmatprep.subr.bf16.mxu0 0
        %1392 = vmatpush1.bf16.xpose.msra.mxu0 0
        %1393 = vmatprep.subr.bf16.mxu0 0
        %1394 = vmatpush1.bf16.xpose.msra.mxu0 0
        %1395 = vmatprep.subr.bf16.mxu0 0
        %1396 = vmatpush1.bf16.xpose.msra.mxu0 0
        %1397 = vmatprep.subr.bf16.mxu0 0
        %1398 = vmatpush1.bf16.xpose.msra.mxu0 0
        %1399 = vmatprep.subr.bf16.mxu0 0
        %1400 = vmatpush1.bf16.xpose.msra.mxu0 0
        %1401 = vmatprep.subr.bf16.mxu0 0
        %1402 = vmatpush1.bf16.xpose.msra.mxu0 0
        %1403 = vmatprep.subr.bf16.mxu0 0
        %1404 = vmatpush1.bf16.xpose.msra.mxu0 0
        %1405 = vmatprep.subr.bf16.mxu0 0
        %1406 = vmatpush1.bf16.xpose.msra.mxu0 %v1386
        %1407 = vmatprep.subr.bf16.mxu0 0
        %1408 = vmatpush2.bf16.xpose.msra.mxu0 0
        %1409 = vmatprep.subr.bf16.mxu0 0
        %1410 = vmatpush2.bf16.xpose.msra.mxu0 0
        %1411 = vmatprep.subr.bf16.mxu0 0
        %1412 = vmatpush2.bf16.xpose.msra.mxu0 0
        %1413 = vmatprep.subr.bf16.mxu0 0
        %1414 = vmatpush2.bf16.xpose.msra.mxu0 0
        %1415 = vmatprep.subr.bf16.mxu0 0
        %1416 = vmatpush2.bf16.xpose.msra.mxu0 0
        %1417 = vmatprep.subr.bf16.mxu0 0
        %1418 = vmatpush2.bf16.xpose.msra.mxu0 0
        %1419 = vmatprep.subr.bf16.mxu0 0
        %1420 = vmatpush2.bf16.xpose.msra.mxu0 0
        %1421 = vmatprep.subr.bf16.mxu0 0
        %1422 = vmatpush2.bf16.xpose.msra.mxu0 0
        %1423 = vmatprep.mubr.bf16.mxu0 0
        %1424 = vmatmul.mubr.bf16.gmra.mxu0 %v469
        %v1425 = vpop.f32.mrf.mxu0
        %v1426 = vadd.f32 0.0, %v1425
        %v1427 = vpop.f32.mrf.mxu0
        %v1428 = vpop.f32.mrf.mxu0
        %v1429 = vadd.f32 0.0, %v1428
        %v1430 = vpop.f32.mrf.mxu0
        %1431 = vdwg.mxu0
        %1432 = vmatprep.subr.bf16.mxu0 0
        %1433 = vmatpush1.bf16.xpose.msra.mxu0 0
        %1434 = vmatprep.subr.bf16.mxu0 0
        %1435 = vmatpush1.bf16.xpose.msra.mxu0 0
        %1436 = vmatprep.subr.bf16.mxu0 0
        %1437 = vmatpush1.bf16.xpose.msra.mxu0 0
        %1438 = vmatprep.subr.bf16.mxu0 0
        %1439 = vmatpush1.bf16.xpose.msra.mxu0 0
        %1440 = vmatprep.subr.bf16.mxu0 0
        %1441 = vmatpush1.bf16.xpose.msra.mxu0 0
        %1442 = vmatprep.subr.bf16.mxu0 0
        %1443 = vmatpush1.bf16.xpose.msra.mxu0 0
        %1444 = vmatprep.subr.bf16.mxu0 0
        %1445 = vmatpush1.bf16.xpose.msra.mxu0 0
        %1446 = vmatprep.subr.bf16.mxu0 0
        %1447 = vmatpush1.bf16.xpose.msra.mxu0 %v1388
        %1448 = vmatprep.subr.bf16.mxu0 0
        %1449 = vmatpush2.bf16.xpose.msra.mxu0 0
        %1450 = vmatprep.subr.bf16.mxu0 0
        %1451 = vmatpush2.bf16.xpose.msra.mxu0 0
        %1452 = vmatprep.subr.bf16.mxu0 0
        %1453 = vmatpush2.bf16.xpose.msra.mxu0 0
        %1454 = vmatprep.subr.bf16.mxu0 0
        %1455 = vmatpush2.bf16.xpose.msra.mxu0 0
        %1456 = vmatprep.subr.bf16.mxu0 0
        %1457 = vmatpush2.bf16.xpose.msra.mxu0 0
        %1458 = vmatprep.subr.bf16.mxu0 0
        %1459 = vmatpush2.bf16.xpose.msra.mxu0 0
        %1460 = vmatprep.subr.bf16.mxu0 0
        %1461 = vmatpush2.bf16.xpose.msra.mxu0 0
        %1462 = vmatprep.subr.bf16.mxu0 0
        %1463 = vmatpush2.bf16.xpose.msra.mxu0 0
        %1464 = vmatprep.mubr.bf16.mxu0 0
        %1465 = vmatmul.mubr.bf16.gmra.mxu0 %v469
        %v1466 = vpop.f32.mrf.mxu0
        %v1467 = vadd.f32 0.0, %v1466
        %v1468 = vpop.f32.mrf.mxu0
        %v1469 = vpop.f32.mrf.mxu0
        %v1470 = vadd.f32 0.0, %v1469
        %v1471 = vpop.f32.mrf.mxu0
        %1472 = vdwg.mxu0
        %1473 = vmatprep.subr.bf16.mxu0 0
        %1474 = vmatpush1.bf16.xpose.msra.mxu0 0
        %1475 = vmatprep.subr.bf16.mxu0 0
        %1476 = vmatpush1.bf16.xpose.msra.mxu0 0
        %1477 = vmatprep.subr.bf16.mxu0 0
        %1478 = vmatpush1.bf16.xpose.msra.mxu0 0
        %1479 = vmatprep.subr.bf16.mxu0 0
        %1480 = vmatpush1.bf16.xpose.msra.mxu0 0
        %1481 = vmatprep.subr.bf16.mxu0 0
        %1482 = vmatpush1.bf16.xpose.msra.mxu0 0
        %1483 = vmatprep.subr.bf16.mxu0 0
        %1484 = vmatpush1.bf16.xpose.msra.mxu0 0
        %1485 = vmatprep.subr.bf16.mxu0 0
        %1486 = vmatpush1.bf16.xpose.msra.mxu0 0
        %1487 = vmatprep.subr.bf16.mxu0 0
        %1488 = vmatpush1.bf16.xpose.msra.mxu0 %v1390
        %1489 = vmatprep.subr.bf16.mxu0 0
        %1490 = vmatpush2.bf16.xpose.msra.mxu0 0
        %1491 = vmatprep.subr.bf16.mxu0 0
        %1492 = vmatpush2.bf16.xpose.msra.mxu0 0
        %1493 = vmatprep.subr.bf16.mxu0 0
        %1494 = vmatpush2.bf16.xpose.msra.mxu0 0
        %1495 = vmatprep.subr.bf16.mxu0 0
        %1496 = vmatpush2.bf16.xpose.msra.mxu0 0
        %1497 = vmatprep.subr.bf16.mxu0 0
        %1498 = vmatpush2.bf16.xpose.msra.mxu0 0
        %1499 = vmatprep.subr.bf16.mxu0 0
        %1500 = vmatpush2.bf16.xpose.msra.mxu0 0
        %1501 = vmatprep.subr.bf16.mxu0 0
        %1502 = vmatpush2.bf16.xpose.msra.mxu0 0
        %1503 = vmatprep.subr.bf16.mxu0 0
        %1504 = vmatpush2.bf16.xpose.msra.mxu0 0
        %1505 = vmatprep.mubr.bf16.mxu0 0
        %1506 = vmatmul.mubr.bf16.gmra.mxu0 %v469
        %v1507 = vpop.f32.mrf.mxu0
        %v1508 = vadd.f32 0.0, %v1507
        %v1509 = vpop.f32.mrf.mxu0
        %v1510 = vpop.f32.mrf.mxu0
        %v1511 = vadd.f32 0.0, %v1510
        %v1512 = vpop.f32.mrf.mxu0
        %1513 = vdwg.mxu0
        %v1514 = vpack.c.bf16 %v1429, %v1426
        %v1515 = vpack.c.bf16 %v1470, %v1467
        %v1517 = vsel %vm612, %v1514, 0
        %v1520 = vsel %vm612, %v1515, 0
        %1522 = vmatprep.subr.bf16.mxu0 0
        %1523 = vmatpush1.bf16.xpose.msra.mxu0 0
        %1524 = vmatprep.subr.bf16.mxu0 0
        %1525 = vmatpush1.bf16.xpose.msra.mxu0 0
        %1526 = vmatprep.subr.bf16.mxu0 0
        %1527 = vmatpush1.bf16.xpose.msra.mxu0 0
        %1528 = vmatprep.subr.bf16.mxu0 0
        %1529 = vmatpush1.bf16.xpose.msra.mxu0 0
        %1530 = vmatprep.subr.bf16.mxu0 0
        %1531 = vmatpush1.bf16.xpose.msra.mxu0 0
        %1532 = vmatprep.subr.bf16.mxu0 0
        %1533 = vmatpush1.bf16.xpose.msra.mxu0 0
        %1534 = vmatprep.subr.bf16.mxu0 0
        %1535 = vmatpush1.bf16.xpose.msra.mxu0 0
        %1536 = vmatprep.subr.bf16.mxu0 0
        %1537 = vmatpush1.bf16.xpose.msra.mxu0 %v1520
        %1538 = vmatprep.subr.bf16.mxu0 0
        %1539 = vmatpush2.bf16.xpose.msra.mxu0 0
        %1540 = vmatprep.subr.bf16.mxu0 0
        %1541 = vmatpush2.bf16.xpose.msra.mxu0 0
        %1542 = vmatprep.subr.bf16.mxu0 0
        %1543 = vmatpush2.bf16.xpose.msra.mxu0 0
        %1544 = vmatprep.subr.bf16.mxu0 0
        %1545 = vmatpush2.bf16.xpose.msra.mxu0 0
        %1546 = vmatprep.subr.bf16.mxu0 0
        %1547 = vmatpush2.bf16.xpose.msra.mxu0 0
        %1548 = vmatprep.subr.bf16.mxu0 0
        %1549 = vmatpush2.bf16.xpose.msra.mxu0 0
        %1550 = vmatprep.subr.bf16.mxu0 0
        %1551 = vmatpush2.bf16.xpose.msra.mxu0 0
        %1552 = vmatprep.subr.bf16.mxu0 0
        %1553 = vmatpush2.bf16.xpose.msra.mxu0 0
        %1554 = vmatprep.mubr.bf16.mxu0 0
        %1555 = vmatmul.mubr.bf16.gmra.mxu0 %v1517
        %v1556 = vpop.f32.mrf.mxu0
        %v1557 = vadd.f32 0.0, %v1556
        %v1558 = vpop.f32.mrf.mxu0
        %v1559 = vpop.f32.mrf.mxu0
        %v1560 = vadd.f32 0.0, %v1559
        %v1561 = vpop.f32.mrf.mxu0
        %1562 = vdwg.mxu0
        %v1563 = vmul.f32 %v1557, 0.35355338
        %v1564 = vmul.f32 %v1560, 0.35355338
        %v1565 = vsel %vm480, -1e+30, %v1563
        %v1566 = vsel %vm481, -1e+30, %v1564
        %v1567 = vsel %vm664, %v1565, -inf
        %1568 = vmax.xlane.f32.xlu0 %v1567
        %v1569 = vpop.xlane.xlu0 %1568
        %v1570 = vsel %vm664, %v1566, -inf
        %1571 = vmax.xlane.f32.xlu0 %v1570
        %v1572 = vpop.xlane.xlu0 %1571
        %v1573 = vsub.f32 %v1565, %v1569
        %v1574 = vsub.f32 %v1566, %v1572
        %v1575 = vmul.f32 %v1573, 1.442695
        %v1576 = vpow.pop %v1575
        %v1577 = vmul.f32 %v1574, 1.442695
        %v1578 = vpow.pop %v1577
        %v1579 = vsel %vm664, %v1576, 0.0
        %1580 = vadd.xlane.f32.xlu0 %v1579
        %v1581 = vpop.xlane.xlu0 %1580
        %v1582 = vsel %vm664, %v1578, 0.0
        %1583 = vadd.xlane.f32.xlu0 %v1582
        %v1584 = vpop.xlane.xlu0 %1583
        %v1585 = vrcp.pop %v1581
        %v1586 = vrcp.pop %v1584
        %v1587 = vmul.f32 %v1576, %v1585
        %v1588 = vmul.f32 %v1578, %v1586
        %v1589 = vpack.c.bf16 %v1588, %v1587
        %v1590 = vpack.c.bf16 %v1511, %v1508
        %v1592 = vsel %vm664, %v1589, 0
        %1594 = vmatprep.subr.bf16.mxu0 0
        %1595 = vmatpush1.bf16.msra.mxu0 0
        %1596 = vmatprep.subr.bf16.mxu0 0
        %1597 = vmatpush1.bf16.msra.mxu0 0
        %1598 = vmatprep.subr.bf16.mxu0 0
        %1599 = vmatpush1.bf16.msra.mxu0 0
        %1600 = vmatprep.subr.bf16.mxu0 0
        %1601 = vmatpush1.bf16.msra.mxu0 0
        %1602 = vmatprep.subr.bf16.mxu0 0
        %1603 = vmatpush1.bf16.msra.mxu0 0
        %1604 = vmatprep.subr.bf16.mxu0 0
        %1605 = vmatpush1.bf16.msra.mxu0 0
        %1606 = vmatprep.subr.bf16.mxu0 0
        %1607 = vmatpush1.bf16.msra.mxu0 0
        %1608 = vmatprep.subr.bf16.mxu0 0
        %1609 = vmatpush1.bf16.msra.mxu0 %v1590
        %1610 = vmatprep.subr.bf16.mxu0 0
        %1611 = vmatpush2.bf16.msra.mxu0 0
        %1612 = vmatprep.subr.bf16.mxu0 0
        %1613 = vmatpush2.bf16.msra.mxu0 0
        %1614 = vmatprep.subr.bf16.mxu0 0
        %1615 = vmatpush2.bf16.msra.mxu0 0
        %1616 = vmatprep.subr.bf16.mxu0 0
        %1617 = vmatpush2.bf16.msra.mxu0 0
        %1618 = vmatprep.subr.bf16.mxu0 0
        %1619 = vmatpush2.bf16.msra.mxu0 0
        %1620 = vmatprep.subr.bf16.mxu0 0
        %1621 = vmatpush2.bf16.msra.mxu0 0
        %1622 = vmatprep.subr.bf16.mxu0 0
        %1623 = vmatpush2.bf16.msra.mxu0 0
        %1624 = vmatprep.subr.bf16.mxu0 0
        %1625 = vmatpush2.bf16.msra.mxu0 0
        %1626 = vmatprep.mubr.bf16.mxu0 0
        %1627 = vmatmul.mubr.bf16.gmra.mxu0 %v1592
        %v1628 = vpop.f32.mrf.mxu0
        %v1629 = vadd.f32 0.0, %v1628
        %v1630 = vpop.f32.mrf.mxu0
        %v1631 = vpop.f32.mrf.mxu0
        %v1632 = vadd.f32 0.0, %v1631
        %v1633 = vpop.f32.mrf.mxu0
        %1634 = vdwg.mxu0
        %v1635 = vpack.c.bf16 %v1632, %v1629
        %s1636 = scalar_lea.vmem %s440, 12
        %v1637 = vld [vmem:[%s1636] sm:$0xf]
        %v1639 = vsel %vm612, %v1635, 0
        %v1642 = vsel %vm991, %v1637, 0
        %1644 = vmatprep.subr.bf16.mxu0 0
        %1645 = vmatpush1.bf16.msra.mxu0 0
        %1646 = vmatprep.subr.bf16.mxu0 0
        %1647 = vmatpush1.bf16.msra.mxu0 0
        %1648 = vmatprep.subr.bf16.mxu0 0
        %1649 = vmatpush1.bf16.msra.mxu0 0
        %1650 = vmatprep.subr.bf16.mxu0 0
        %1651 = vmatpush1.bf16.msra.mxu0 0
        %1652 = vmatprep.subr.bf16.mxu0 0
        %1653 = vmatpush1.bf16.msra.mxu0 0
        %1654 = vmatprep.subr.bf16.mxu0 0
        %1655 = vmatpush1.bf16.msra.mxu0 0
        %1656 = vmatprep.subr.bf16.mxu0 0
        %1657 = vmatpush1.bf16.msra.mxu0 0
        %1658 = vmatprep.subr.bf16.mxu0 0
        %1659 = vmatpush1.bf16.msra.mxu0 %v1642
        %1660 = vmatprep.subr.bf16.mxu0 0
        %1661 = vmatpush2.bf16.msra.mxu0 0
        %1662 = vmatprep.subr.bf16.mxu0 0
        %1663 = vmatpush2.bf16.msra.mxu0 0
        %1664 = vmatprep.subr.bf16.mxu0 0
        %1665 = vmatpush2.bf16.msra.mxu0 0
        %1666 = vmatprep.subr.bf16.mxu0 0
        %1667 = vmatpush2.bf16.msra.mxu0 0
        %1668 = vmatprep.subr.bf16.mxu0 0
        %1669 = vmatpush2.bf16.msra.mxu0 0
        %1670 = vmatprep.subr.bf16.mxu0 0
        %1671 = vmatpush2.bf16.msra.mxu0 0
        %1672 = vmatprep.subr.bf16.mxu0 0
        %1673 = vmatpush2.bf16.msra.mxu0 0
        %1674 = vmatprep.subr.bf16.mxu0 0
        %1675 = vmatpush2.bf16.msra.mxu0 0
        %1676 = vmatprep.mubr.bf16.mxu0 0
        %1677 = vmatmul.mubr.bf16.gmra.mxu0 %v1639
        %v1678 = vpop.f32.mrf.mxu0
        %v1679 = vadd.f32 0.0, %v1678
        %v1680 = vpop.f32.mrf.mxu0
        %v1681 = vpop.f32.mrf.mxu0
        %v1682 = vadd.f32 0.0, %v1681
        %v1683 = vpop.f32.mrf.mxu0
        %1684 = vdwg.mxu0
        %v1685 = vadd.f32 %v1383, %v1679
        %v1686 = vadd.f32 %v1384, %v1682
        %v1687 = vadd.f32 %v467, %v1685
        %v1688 = vadd.f32 %v468, %v1686
        %vm1689 = vcmp.lt.s32.totalorder %v474, 32
        %v1690 = vsel %vm1689, 1, 0
        %v1691 = vcvt.s32.f32 %v1690
        %v1692 = vmul.f32 %v1687, %v1691
        %v1693 = vmul.f32 %v1688, %v1691
        %1694 = vadd.xlane.f32.xlu0 %v1692
        %v1695 = vpop.xlane.xlu0 %1694
        %1696 = vadd.xlane.f32.xlu0 %v1693
        %v1697 = vpop.xlane.xlu0 %1696
        %v1698 = vmul.f32 %v1695, 0.03125
        %v1699 = vmul.f32 %v1697, 0.03125
        %v1700 = vsub.f32 %v1687, %v1698
        %v1701 = vsub.f32 %v1688, %v1699
        %v1702 = vmul.f32 %v1700, %v1691
        %v1703 = vmul.f32 %v1701, %v1691
        %v1704 = vmul.f32 %v1702, %v1702
        %v1705 = vmul.f32 %v1703, %v1703
        %1706 = vadd.xlane.f32.xlu0 %v1704
        %v1707 = vpop.xlane.xlu0 %1706
        %1708 = vadd.xlane.f32.xlu0 %v1705
        %v1709 = vpop.xlane.xlu0 %1708
        %v1710 = vmul.f32 %v1707, 0.03125
        %v1711 = vmul.f32 %v1709, 0.03125
        %v1712 = vadd.f32 %v1710, 1e-05
        %v1713 = vadd.f32 %v1711, 1e-05
        %v1714 = vrsqrt.pop %v1712
        %v1715 = vrsqrt.pop %v1713
        %v1716 = vmul.f32 %v1702, %v1714
        %v1717 = vmul.f32 %v1703, %v1715
        %v1718 = vpack.c.bf16 %v1717, %v1716
        %v1719 = vld [vmem:[%s445] sm:$0xf]
        %v1720 = vld [vmem:[%s445 + $0x4] sm:$0xf]
        %v1721 = vld [vmem:[%s445 + $0x8] sm:$0xf]
        %v1722 = vld [vmem:[%s445 + $0xc] sm:$0xf]
        %v1723 = vld [vmem:[%s445 + $0x10] sm:$0xf]
        %v1724 = vld [vmem:[%s445 + $0x14] sm:$0xf]
        %v1725 = vld [vmem:[%s445 + $0x18] sm:$0xf]
        %v1726 = vld [vmem:[%s445 + $0x1c] sm:$0xf]
        %v1727 = vld [vmem:[%s445 + $0x20] sm:$0xf]
        %v1728 = vld [vmem:[%s445 + $0x24] sm:$0xf]
        %v1729 = vld [vmem:[%s445 + $0x28] sm:$0xf]
        %v1730 = vld [vmem:[%s445 + $0x2c] sm:$0xf]
        %v1731 = vld [vmem:[%s445 + $0x30] sm:$0xf]
        %v1732 = vld [vmem:[%s445 + $0x34] sm:$0xf]
        %v1733 = vld [vmem:[%s445 + $0x38] sm:$0xf]
        %v1734 = vld [vmem:[%s445 + $0x3c] sm:$0xf]
        %v1735 = vld [vmem:[%s448] sm:$0x1]
        %v1737 = vlaneseq
        %v1738 = vshrl.u32 %v1737, 7
        %v1739 = vsub.s32 0, %v1738
        %v1740 = vrot.slane %v1735, %v1739
        %v1758 = vunpack.c.l.b16 %v1719
        %v1759 = vunpack.c.l.b16 %v1720
        %v1760 = vunpack.c.l.b16 %v1721
        %v1761 = vunpack.c.l.b16 %v1722
        %v1762 = vunpack.c.l.b16 %v1723
        %v1763 = vunpack.c.l.b16 %v1724
        %v1764 = vunpack.c.l.b16 %v1725
        %v1765 = vunpack.c.l.b16 %v1726
        %v1766 = vunpack.c.l.b16 %v1727
        %v1767 = vunpack.c.l.b16 %v1728
        %v1768 = vunpack.c.l.b16 %v1729
        %v1769 = vunpack.c.l.b16 %v1730
        %v1770 = vunpack.c.l.b16 %v1731
        %v1771 = vunpack.c.l.b16 %v1732
        %v1772 = vunpack.c.l.b16 %v1733
        %v1773 = vunpack.c.l.b16 %v1734
        %v1774 = vpack.c.b16 %v1759, %v1758
        %v1775 = vpack.c.b16 %v1761, %v1760
        %v1776 = vpack.c.b16 %v1763, %v1762
        %v1777 = vpack.c.b16 %v1765, %v1764
        %v1778 = vpack.c.b16 %v1767, %v1766
        %v1779 = vpack.c.b16 %v1769, %v1768
        %v1780 = vpack.c.b16 %v1771, %v1770
        %v1781 = vpack.c.b16 %v1773, %v1772
        %1790 = vmatprep.subr.bf16.mxu0 0
        %1791 = vmatpush1.bf16.msra.mxu0 %v1781
        %1792 = vmatprep.subr.bf16.mxu0 0
        %1793 = vmatpush1.bf16.msra.mxu0 %v1780
        %1794 = vmatprep.subr.bf16.mxu0 0
        %1795 = vmatpush1.bf16.msra.mxu0 %v1779
        %1796 = vmatprep.subr.bf16.mxu0 0
        %1797 = vmatpush1.bf16.msra.mxu0 %v1778
        %1798 = vmatprep.subr.bf16.mxu0 0
        %1799 = vmatpush1.bf16.msra.mxu0 %v1777
        %1800 = vmatprep.subr.bf16.mxu0 0
        %1801 = vmatpush1.bf16.msra.mxu0 %v1776
        %1802 = vmatprep.subr.bf16.mxu0 0
        %1803 = vmatpush1.bf16.msra.mxu0 %v1775
        %1804 = vmatprep.subr.bf16.mxu0 0
        %1805 = vmatpush1.bf16.msra.mxu0 %v1774
        %1806 = vmatprep.subr.bf16.mxu0 0
        %1807 = vmatpush2.bf16.msra.mxu0 0
        %1808 = vmatprep.subr.bf16.mxu0 0
        %1809 = vmatpush2.bf16.msra.mxu0 0
        %1810 = vmatprep.subr.bf16.mxu0 0
        %1811 = vmatpush2.bf16.msra.mxu0 0
        %1812 = vmatprep.subr.bf16.mxu0 0
        %1813 = vmatpush2.bf16.msra.mxu0 0
        %1814 = vmatprep.subr.bf16.mxu0 0
        %1815 = vmatpush2.bf16.msra.mxu0 0
        %1816 = vmatprep.subr.bf16.mxu0 0
        %1817 = vmatpush2.bf16.msra.mxu0 0
        %1818 = vmatprep.subr.bf16.mxu0 0
        %1819 = vmatpush2.bf16.msra.mxu0 0
        %1820 = vmatprep.subr.bf16.mxu0 0
        %1821 = vmatpush2.bf16.msra.mxu0 0
        %1822 = vmatprep.mubr.bf16.mxu0 0
        %1823 = vmatmul.mubr.bf16.gmra.mxu0 %v1718
        %v1824 = vpop.f32.mrf.mxu0
        %v1825 = vadd.f32 %v1740, %v1824
        %v1826 = vpop.f32.mrf.mxu0
        %v1827 = vpop.f32.mrf.mxu0
        %v1828 = vadd.f32 %v1740, %v1827
        %v1829 = vpop.f32.mrf.mxu0
        %1830 = vdwg.mxu0
        %v1831 = vmax.f32 %v1825, 0.0
        %v1832 = vmax.f32 %v1828, 0.0
        %v1833 = vpack.c.bf16 %v1832, %v1831
        %v1834 = vld [vmem:[%s453] sm:$0xf]
        %v1835 = vld [vmem:[%s453 + $0x4] sm:$0xf]
        %v1836 = vld [vmem:[%s453 + $0x8] sm:$0xf]
        %v1837 = vld [vmem:[%s453 + $0xc] sm:$0xf]
        %v1838 = vld [vmem:[%s453 + $0x10] sm:$0xf]
        %v1839 = vld [vmem:[%s453 + $0x14] sm:$0xf]
        %v1840 = vld [vmem:[%s453 + $0x18] sm:$0xf]
        %v1841 = vld [vmem:[%s453 + $0x1c] sm:$0xf]
        %v1842 = vld [vmem:[%s453 + $0x20] sm:$0xf]
        %v1843 = vld [vmem:[%s453 + $0x24] sm:$0xf]
        %v1844 = vld [vmem:[%s453 + $0x28] sm:$0xf]
        %v1845 = vld [vmem:[%s453 + $0x2c] sm:$0xf]
        %v1846 = vld [vmem:[%s453 + $0x30] sm:$0xf]
        %v1847 = vld [vmem:[%s453 + $0x34] sm:$0xf]
        %v1848 = vld [vmem:[%s453 + $0x38] sm:$0xf]
        %v1849 = vld [vmem:[%s453 + $0x3c] sm:$0xf]
        %v1850 = vld [vmem:[%s456] sm:$0x1]
        %v1852 = vlaneseq
        %v1853 = vshrl.u32 %v1852, 7
        %v1854 = vsub.s32 0, %v1853
        %v1855 = vrot.slane %v1850, %v1854
        %v1873 = vunpack.c.l.b16 %v1834
        %v1874 = vunpack.c.l.b16 %v1835
        %v1875 = vunpack.c.l.b16 %v1836
        %v1876 = vunpack.c.l.b16 %v1837
        %v1877 = vunpack.c.l.b16 %v1838
        %v1878 = vunpack.c.l.b16 %v1839
        %v1879 = vunpack.c.l.b16 %v1840
        %v1880 = vunpack.c.l.b16 %v1841
        %v1881 = vunpack.c.l.b16 %v1842
        %v1882 = vunpack.c.l.b16 %v1843
        %v1883 = vunpack.c.l.b16 %v1844
        %v1884 = vunpack.c.l.b16 %v1845
        %v1885 = vunpack.c.l.b16 %v1846
        %v1886 = vunpack.c.l.b16 %v1847
        %v1887 = vunpack.c.l.b16 %v1848
        %v1888 = vunpack.c.l.b16 %v1849
        %v1889 = vpack.c.b16 %v1874, %v1873
        %v1890 = vpack.c.b16 %v1876, %v1875
        %v1891 = vpack.c.b16 %v1878, %v1877
        %v1892 = vpack.c.b16 %v1880, %v1879
        %v1893 = vpack.c.b16 %v1882, %v1881
        %v1894 = vpack.c.b16 %v1884, %v1883
        %v1895 = vpack.c.b16 %v1886, %v1885
        %v1896 = vpack.c.b16 %v1888, %v1887
        %1905 = vmatprep.subr.bf16.mxu0 0
        %1906 = vmatpush1.bf16.msra.mxu0 %v1896
        %1907 = vmatprep.subr.bf16.mxu0 0
        %1908 = vmatpush1.bf16.msra.mxu0 %v1895
        %1909 = vmatprep.subr.bf16.mxu0 0
        %1910 = vmatpush1.bf16.msra.mxu0 %v1894
        %1911 = vmatprep.subr.bf16.mxu0 0
        %1912 = vmatpush1.bf16.msra.mxu0 %v1893
        %1913 = vmatprep.subr.bf16.mxu0 0
        %1914 = vmatpush1.bf16.msra.mxu0 %v1892
        %1915 = vmatprep.subr.bf16.mxu0 0
        %1916 = vmatpush1.bf16.msra.mxu0 %v1891
        %1917 = vmatprep.subr.bf16.mxu0 0
        %1918 = vmatpush1.bf16.msra.mxu0 %v1890
        %1919 = vmatprep.subr.bf16.mxu0 0
        %1920 = vmatpush1.bf16.msra.mxu0 %v1889
        %1921 = vmatprep.subr.bf16.mxu0 0
        %1922 = vmatpush2.bf16.msra.mxu0 0
        %1923 = vmatprep.subr.bf16.mxu0 0
        %1924 = vmatpush2.bf16.msra.mxu0 0
        %1925 = vmatprep.subr.bf16.mxu0 0
        %1926 = vmatpush2.bf16.msra.mxu0 0
        %1927 = vmatprep.subr.bf16.mxu0 0
        %1928 = vmatpush2.bf16.msra.mxu0 0
        %1929 = vmatprep.subr.bf16.mxu0 0
        %1930 = vmatpush2.bf16.msra.mxu0 0
        %1931 = vmatprep.subr.bf16.mxu0 0
        %1932 = vmatpush2.bf16.msra.mxu0 0
        %1933 = vmatprep.subr.bf16.mxu0 0
        %1934 = vmatpush2.bf16.msra.mxu0 0
        %1935 = vmatprep.subr.bf16.mxu0 0
        %1936 = vmatpush2.bf16.msra.mxu0 0
        %1937 = vmatprep.mubr.bf16.mxu0 0
        %1938 = vmatmul.mubr.bf16.gmra.mxu0 %v1833
        %v1939 = vpop.f32.mrf.mxu0
        %v1940 = vadd.f32 %v1855, %v1939
        %v1941 = vpop.f32.mrf.mxu0
        %v1942 = vpop.f32.mrf.mxu0
        %v1943 = vadd.f32 %v1855, %v1942
        %v1944 = vpop.f32.mrf.mxu0
        %1945 = vdwg.mxu0
        %v1946 = vadd.f32 %v1940, %v1716
        %v1947 = vadd.f32 %v1943, %v1717
        %v1948 = vmul.f32 %v1946, %v1691
        %v1949 = vmul.f32 %v1947, %v1691
        %1950 = vadd.xlane.f32.xlu0 %v1948
        %v1951 = vpop.xlane.xlu0 %1950
        %1952 = vadd.xlane.f32.xlu0 %v1949
        %v1953 = vpop.xlane.xlu0 %1952
        %v1954 = vmul.f32 %v1951, 0.03125
        %v1955 = vmul.f32 %v1953, 0.03125
        %v1956 = vsub.f32 %v1946, %v1954
        %v1957 = vsub.f32 %v1947, %v1955
        %v1958 = vmul.f32 %v1956, %v1691
        %v1959 = vmul.f32 %v1957, %v1691
        %v1960 = vmul.f32 %v1958, %v1958
        %v1961 = vmul.f32 %v1959, %v1959
        %1962 = vadd.xlane.f32.xlu0 %v1960
        %v1963 = vpop.xlane.xlu0 %1962
        %1964 = vadd.xlane.f32.xlu0 %v1961
        %v1965 = vpop.xlane.xlu0 %1964
        %v1966 = vmul.f32 %v1963, 0.03125
        %v1967 = vmul.f32 %v1965, 0.03125
        %v1968 = vadd.f32 %v1966, 1e-05
        %v1969 = vadd.f32 %v1967, 1e-05
        %v1970 = vrsqrt.pop %v1968
        %v1971 = vrsqrt.pop %v1969
        %v1972 = vmul.f32 %v1958, %v1970
        %v1973 = vmul.f32 %v1959, %v1971
        %1974 = vst [vmem:[#allocation2] sm:$0xff] %v1972
        %1975 = vst [vmem:[#allocation2 + $0x8] sm:$0xff] %v1973
        %p1976 = scmp.eq.s32.totalorder %s35, 1
        // Predicated region
        $region61: #{node_layer_transformer_forward.1} parent=55 // pred_check
          %p1977 = pneg %p1976
        $region62: #{node_layer_transformer_forward.1} parent=55 // pred_check_branch
          %1979 = sbr.rel (%p1977) target = $region64
        $region63: #{node_layer_transformer_forward.1} parent=55 // pred_region
          %v1980 = vpack.c.bf16 %v1972, %v1972
          %v1981 = vld [vmem:[%s8] sm:$0xf]
          %v1982 = vld [vmem:[%s8 + $0x4] sm:$0xf]
          %v1983 = vld [vmem:[%s8 + $0x8] sm:$0xf]
          %v1984 = vld [vmem:[%s8 + $0xc] sm:$0xf]
          %v1985 = vld [vmem:[%s8 + $0x10] sm:$0xf]
          %v1986 = vld [vmem:[%s8 + $0x14] sm:$0xf]
          %v1987 = vld [vmem:[%s8 + $0x18] sm:$0xf]
          %v1988 = vld [vmem:[%s8 + $0x1c] sm:$0xf]
          %v1989 = vld [vmem:[%s8 + $0x20] sm:$0xf]
          %v1990 = vld [vmem:[%s8 + $0x24] sm:$0xf]
          %v1991 = vld [vmem:[%s8 + $0x28] sm:$0xf]
          %v1992 = vld [vmem:[%s8 + $0x2c] sm:$0xf]
          %v1993 = vld [vmem:[%s8 + $0x30] sm:$0xf]
          %v1994 = vld [vmem:[%s8 + $0x34] sm:$0xf]
          %v1995 = vld [vmem:[%s8 + $0x38] sm:$0xf]
          %v1996 = vld [vmem:[%s8 + $0x3c] sm:$0xf]
          %v2013 = vunpack.c.l.b16 %v1981
          %v2014 = vunpack.c.l.b16 %v1982
          %v2015 = vunpack.c.l.b16 %v1983
          %v2016 = vunpack.c.l.b16 %v1984
          %v2017 = vunpack.c.l.b16 %v1985
          %v2018 = vunpack.c.l.b16 %v1986
          %v2019 = vunpack.c.l.b16 %v1987
          %v2020 = vunpack.c.l.b16 %v1988
          %v2021 = vunpack.c.l.b16 %v1989
          %v2022 = vunpack.c.l.b16 %v1990
          %v2023 = vunpack.c.l.b16 %v1991
          %v2024 = vunpack.c.l.b16 %v1992
          %v2025 = vunpack.c.l.b16 %v1993
          %v2026 = vunpack.c.l.b16 %v1994
          %v2027 = vunpack.c.l.b16 %v1995
          %v2028 = vunpack.c.l.b16 %v1996
          %v2029 = vpack.c.b16 %v2014, %v2013
          %v2030 = vpack.c.b16 %v2016, %v2015
          %v2031 = vpack.c.b16 %v2018, %v2017
          %v2032 = vpack.c.b16 %v2020, %v2019
          %v2033 = vpack.c.b16 %v2022, %v2021
          %v2034 = vpack.c.b16 %v2024, %v2023
          %v2035 = vpack.c.b16 %v2026, %v2025
          %v2036 = vpack.c.b16 %v2028, %v2027
          %2045 = vmatprep.subr.bf16.mxu0 0
          %2046 = vmatpush1.bf16.msra.mxu0 %v2036
          %2047 = vmatprep.subr.bf16.mxu0 0
          %2048 = vmatpush1.bf16.msra.mxu0 %v2035
          %2049 = vmatprep.subr.bf16.mxu0 0
          %2050 = vmatpush1.bf16.msra.mxu0 %v2034
          %2051 = vmatprep.subr.bf16.mxu0 0
          %2052 = vmatpush1.bf16.msra.mxu0 %v2033
          %2053 = vmatprep.subr.bf16.mxu0 0
          %2054 = vmatpush1.bf16.msra.mxu0 %v2032
          %2055 = vmatprep.subr.bf16.mxu0 0
          %2056 = vmatpush1.bf16.msra.mxu0 %v2031
          %2057 = vmatprep.subr.bf16.mxu0 0
          %2058 = vmatpush1.bf16.msra.mxu0 %v2030
          %2059 = vmatprep.subr.bf16.mxu0 0
          %2060 = vmatpush1.bf16.msra.mxu0 %v2029
          %2061 = vmatprep.subr.bf16.mxu0 0
          %2062 = vmatpush2.bf16.msra.mxu0 0
          %2063 = vmatprep.subr.bf16.mxu0 0
          %2064 = vmatpush2.bf16.msra.mxu0 0
          %2065 = vmatprep.subr.bf16.mxu0 0
          %2066 = vmatpush2.bf16.msra.mxu0 0
          %2067 = vmatprep.subr.bf16.mxu0 0
          %2068 = vmatpush2.bf16.msra.mxu0 0
          %2069 = vmatprep.subr.bf16.mxu0 0
          %2070 = vmatpush2.bf16.msra.mxu0 0
          %2071 = vmatprep.subr.bf16.mxu0 0
          %2072 = vmatpush2.bf16.msra.mxu0 0
          %2073 = vmatprep.subr.bf16.mxu0 0
          %2074 = vmatpush2.bf16.msra.mxu0 0
          %2075 = vmatprep.subr.bf16.mxu0 0
          %2076 = vmatpush2.bf16.msra.mxu0 0
          %2077 = vmatprep.mubr.bf16.mxu0 0
          %2078 = vmatmul.mubr.bf16.gmra.mxu0 %v1980
          %v2079 = vpop.f32.mrf.mxu0
          %v2080 = vadd.f32 0.0, %v2079
          %v2081 = vpop.f32.mrf.mxu0
          %v2082 = vpop.f32.mrf.mxu0
          %v2083 = vpop.f32.mrf.mxu0
          %2084 = vdwg.mxu0
          %v2085 = vld [vmem:[%s9] sm:$0x1]
          %v2086 = vadd.f32 %v2080, %v2085
          %2087 = vst [vmem:[%s425] sm:$0x1] %v2086
        $region64: #{node_layer_transformer_forward.1} parent=55 // pred_fallthru
          _
        %s2088 = sand.u32 %s274, 1
        %s2089 = scalar_lea.sflag [#allocation6], %s2088
        %s2090 = sand.u32 %s274, 1
        %s2091 = scalar_lea.vmem [#allocation5], %s2090
        // Predicated region
        $region65: #{node_layer_transformer_forward.1} parent=55 // pred_check
          %p2092 = pneg %p284
        $region66: #{node_layer_transformer_forward.1} parent=55 // pred_check_branch
          %2094 = sbr.rel (%p2092) target = $region68
        $region67: #{node_layer_transformer_forward.1} parent=55 // pred_region
          %s2096 = ssub.s32 16, 16
          %2097 = vsyncadd %s2089, %s2096
          %s2098 = smul.addr %s34, 16
          %s2099 = scalar_lea.hbm %s10, %s2098
          %s2101 = sshll.u32 %s2091, 4
          %s2102 = int_to_ptr.vmem [resolvable:$true] %s2101
          %2104 = dma.vmem_to_hbm [thread:$0]  %s2102, 16, %s2099, %s2089
        $region68: #{node_layer_transformer_forward.1} parent=55 // pred_fallthru
          _
      $region56: #{node_layer_transformer_forward.1} parent=5 // pred_fallthru
        _
      %p2105 = scmp.le.s32.totalorder 2, %s25
      // Predicated region
      $region69: #{node_layer_transformer_forward.1} parent=5 // pred_check
        %p2106 = pneg %p2105
      $region70: #{node_layer_transformer_forward.1} parent=5 // pred_check_branch
        %2108 = sbr.rel (%p2106) target = $region72
      $region71: #{node_layer_transformer_forward.1} parent=5 // pred_region
        %s2109 = ssub.s32 %s25, 2
        // Predicated region
        $region73: #{node_layer_transformer_forward.1} parent=71 // pred_check
          %p2110 = pneg %p290
        $region74: #{node_layer_transformer_forward.1} parent=71 // pred_check_branch
          %2112 = sbr.rel (%p2110) target = $region76
        $region75: #{node_layer_transformer_forward.1} parent=71 // pred_region
          %s2113 = sand.u32 %s275, 1
          %s2114 = scalar_lea.sflag [#allocation6], %s2113
          %s2115 = sand.u32 %s275, 1
          %s2116 = scalar_lea.vmem [#allocation5], %s2115
          %2117 = dma.done %s2114, 16
        $region76: #{node_layer_transformer_forward.1} parent=71 // pred_fallthru
          _
      $region72: #{node_layer_transformer_forward.1} parent=5 // pred_fallthru
        _
    $region6: #{node_layer_transformer_forward.1} parent=1 // loop_footer
      %s29 = sadd.s32 1, %s25
    $region7: #{node_layer_transformer_forward.1} parent=1 // loop_footer_branch
      %24 = sbr.rel target = $region3
    $region8: #{node_layer_transformer_forward.1} parent=1 // loop_exit
      _
    %2118 = vsyncpa [#allocation6], 1
    %s2119 = scalar_lea.sflag [#allocation6], 1
    %2120 = vsyncpa %s2119, 1

</llo_original>
